<compile_context>
chip_gen: v7x
topology: tpu7x:2x2x1
jax: 0.10.0
libtpu: 0.0.40
codegen_flags: <defaults>
</compile_context>

<pallas_src>
import functools

import jax
import jax.numpy as jnp
from jax.experimental import pallas as pl
from jax.experimental.pallas import tpu as pltpu

EPS = 1e-5  # torch.nn.InstanceNorm2d default


def _residual_block_kernel(H, W, C, x_ref, w1_ref, w2_ref, out_ref):
    """Fused residual block for a block of Nb images, (C, H*W) lane-dense."""
    HW = H * W
    Nb = x_ref.shape[0]

    # ---- reflect-padded 3x3 window machinery (built ONCE per grid step,
    #      shared by all Nb images and both convs) --------------------------
    # Flat position p = h*W + w lives on the lane axis.  A +/-1 row shift is a
    # lane roll by +/-W, a +/-1 col shift a lane roll by +/-1; reflection at
    # the borders is handled by selecting between the two roll directions.
    p = jax.lax.broadcasted_iota(jnp.int32, (C, HW), 1)
    if W & (W - 1) == 0:
        wpos = p & (W - 1)
    else:
        wpos = jax.lax.rem(p, W)
    first_row = p < W
    last_row = p >= (H - 1) * W
    first_col = wpos == 0
    last_col = wpos == W - 1

    # Desired flat source index for the four 1-step shifts (with reflection).
    tgt_rm = jnp.where(first_row, p + W, p - W)   # row h-1  (reflect h=0 -> 1)
    tgt_rp = jnp.where(last_row, p - W, p + W)    # row h+1  (reflect H-1 -> H-2)
    tgt_cm = jnp.where(first_col, p + 1, p - 1)   # col w-1
    tgt_cp = jnp.where(last_col, p - 1, p + 1)    # col w+1

    # Roll an iota alongside the data; where the rolled index matches the
    # target, that roll direction is the right one (convention-independent).
    q_row = pltpu.roll(p, W, axis=1)
    q_col = pltpu.roll(p, 1, axis=1)
    sel_rm = q_row == tgt_rm
    sel_rp = q_row == tgt_rp
    sel_cm = q_col == tgt_cm
    sel_cp = q_col == tgt_cp

    inv_hw = 1.0 / HW
    GC = 3 * C  # columns per kernel-row group in the (C, 9C) weight slab

    def conv3x3_instnorm(src, w_ref, relu):
        """Reflect-pad 3x3 conv + InstanceNorm(affine=False) [+ ReLU]."""
        # Row shifts (shared rolls for dh = 0 and dh = 2).
        r_a = pltpu.roll(src, W, axis=1)
        r_b = pltpu.roll(src, HW - W, axis=1)
        rows = (
            jnp.where(sel_rm, r_a, r_b),   # dh = 0 -> source row reflect(h-1)
            src,                           # dh = 1 -> source row h
            jnp.where(sel_rp, r_a, r_b),   # dh = 2 -> source row reflect(h+1)
        )
        # Row-grouped im2col: 3 accumulating K=3C matmuls; only the current
        # group's 3 column taps are live -> bounded vreg pressure.
        acc = None
        for g, y in enumerate(rows):
            c_a = pltpu.roll(y, 1, axis=1)
            c_b = pltpu.roll(y, HW - 1, axis=1)
            cols_g = jnp.concatenate(
                [jnp.where(sel_cm, c_a, c_b),   # dw = 0 -> col reflect(w-1)
                 y,                             # dw = 1 -> col w
                 jnp.where(sel_cp, c_a, c_b)],  # dw = 2 -> col reflect(w+1)
                axis=0)                         # (3C, HW)
            w_g = w_ref[:, GC * g:GC * (g + 1)]  # (C, 3C) static slice
            d = jnp.dot(w_g, cols_g, preferred_element_type=jnp.float32)
            acc = d if acc is None else acc + d
        # NOTE: conv bias intentionally omitted — InstanceNorm2d(affine=False)
        # cancels a per-channel bias exactly, so adding it is dead work.
        # InstanceNorm2d (affine=False, biased var, eps); two-pass f32 stats.
        mean = jnp.sum(acc, axis=1, keepdims=True) * inv_hw
        cen = acc - mean
        var = jnp.sum(cen * cen, axis=1, keepdims=True) * inv_hw
        y = cen * jax.lax.rsqrt(var + EPS)
        if relu:
            y = jnp.maximum(y, 0.0)
        return y

    # Static unroll over the images in this block (Nb is small & static).
    for n in range(Nb):
        x = x_ref[n]                                    # (C, HW) f32
        h1 = conv3x3_instnorm(x, w1_ref, relu=True)
        h2 = conv3x3_instnorm(h1, w2_ref, relu=False)
        out_ref[n] = (x + h2).astype(out_ref.dtype)


def residual_block_forward(x_nchw, params, *, images_per_step=None):
    """ResidualBlock forward.  x_nchw: (N, C, H, W) f32 (PyTorch layout).

    params: (w1, b1, w2, b2) with w*: (3, 3, C, C) HWIO, b*: (C,).
    The biases are accepted for interface fidelity but never touched: the
    affine-free InstanceNorm after each conv makes the output independent
    of them (verified against the biased reference in __main__).
    """
    w1, b1, w2, b2 = params
    del b1, b2  # exactly cancelled by InstanceNorm2d(affine=False)
    N, C, H, W = x_nchw.shape
    assert H >= 2 and W >= 2, "reflection pad of 1 needs H, W >= 2"
    HW = H * W

    if images_per_step is None:
        # Whole batch per grid step: amortizes per-step overhead and the
        # reflection-mask construction.  On v7x, pass ceil(N/2) instead so
        # both TensorCores get a chunk.
        images_per_step = N
    nb = max(1, min(images_per_step, N))
    assert N % nb == 0, "batch must divide evenly into image blocks"

    # Free metadata reshapes only — compute stays in NCHW-flat layout.
    x_flat = x_nchw.reshape(N, C, HW)
    # (dh, dw, Cin, Cout) -> (Cout, dh, dw, Cin) -> (Cout, 9*Cin).
    # Columns are contiguous (dw, Cin) groups per dh, so the kernel can slice
    # a (C, 3C) slab per kernel row.
    w1k = jnp.transpose(w1, (3, 0, 1, 2)).reshape(C, 9 * C)
    w2k = jnp.transpose(w2, (3, 0, 1, 2)).reshape(C, 9 * C)

    kernel = functools.partial(_residual_block_kernel, H, W, C)

    out_flat = pl.pallas_call(
        kernel,
        out_shape=jax.ShapeDtypeStruct((N, C, HW), jnp.float32),
        grid_spec=pltpu.PrefetchScalarGridSpec(
            num_scalar_prefetch=0,
            grid=(N // nb,),
            in_specs=[
                pl.BlockSpec((nb, C, HW), lambda i: (i, 0, 0)),   # x block
                pl.BlockSpec((C, 9 * C), lambda i: (0, 0)),       # w1 (resident)
                pl.BlockSpec((C, 9 * C), lambda i: (0, 0)),       # w2 (resident)
            ],
            out_specs=pl.BlockSpec((nb, C, HW), lambda i: (i, 0, 0)),
        ),
        compiler_params=pltpu.CompilerParams(
            dimension_semantics=("parallel",),      # image blocks independent
            vmem_limit_bytes=32 * 1024 * 1024,      # headroom (v5e default 16M)
        ),
    )(x_flat, w1k, w2k)

    return out_flat.reshape(N, C, H, W)


def _reference_forward(x_nchw, params):
    """Pure-JAX reference (XLA conv, WITH biases) for the correctness check."""
    w1, b1, w2, b2 = params
    x = jnp.transpose(x_nchw, (0, 2, 3, 1))  # NHWC

    def conv(xp, w, b):
        y = jax.lax.conv_general_dilated(
            xp, w, (1, 1), "VALID", dimension_numbers=("NHWC", "HWIO", "NHWC")
        )
        return y + b[None, None, None, :]

    def inorm(y):
        m = jnp.mean(y, axis=(1, 2), keepdims=True)
        v = jnp.mean((y - m) ** 2, axis=(1, 2), keepdims=True)
        return (y - m) * jax.lax.rsqrt(v + EPS)

    xp = jnp.pad(x, ((0, 0), (1, 1), (1, 1), (0, 0)), mode="reflect")
    h = jnp.maximum(inorm(conv(xp, w1, b1)), 0.0)
    hp = jnp.pad(h, ((0, 0), (1, 1), (1, 1), (0, 0)), mode="reflect")
    out = x + inorm(conv(hp, w2, b2))
    return jnp.transpose(out, (0, 3, 1, 2))


if __name__ == "__main__":
    N, C, H, W = 2, 8, 16, 16  # in_features = 8

    key = jax.random.PRNGKey(0)
    kx, kw1, kb1, kw2, kb2 = jax.random.split(key, 5)

    x = jax.random.normal(kx, (N, C, H, W), dtype=jnp.float32)

    # Conv2d(C, C, 3) parameters in HWIO layout (== torch weight (O, I, 3, 3)
    # transposed to (3, 3, I, O)).
    scale = 1.0 / jnp.sqrt(C * 9.0)
    w1 = jax.random.normal(kw1, (3, 3, C, C), dtype=jnp.float32) * scale
    b1 = jax.random.normal(kb1, (C,), dtype=jnp.float32) * scale
    w2 = jax.random.normal(kw2, (3, 3, C, C), dtype=jnp.float32) * scale
    b2 = jax.random.normal(kb2, (C,), dtype=jnp.float32) * scale
    params = (w1, b1, w2, b2)

    out = jax.block_until_ready(residual_block_forward(x, params))
    ref = jax.block_until_ready(_reference_forward(x, params))

    assert out.shape == (N, C, H, W)
    assert bool(jnp.allclose(out, ref, atol=1e-4, rtol=1e-4)), "mismatch vs reference"

    print("KERNEL_OK")
</pallas_src>

<mosaic_0001>
module attributes {stable_mosaic.version = 11 : i64} {
  func.func @_residual_block_kernel(%arg0: i32, %arg1: memref<2x8x256xf32, #tpu.memory_space<vmem>>, %arg2: memref<8x72xf32, #tpu.memory_space<vmem>>, %arg3: memref<8x72xf32, #tpu.memory_space<vmem>>, %arg4: memref<2x8x256xf32, #tpu.memory_space<vmem>>) attributes {dimension_semantics = [#tpu.dimension_semantics<parallel>], iteration_bounds = array<i64: 1>, scalar_prefetch = 0 : i64, scratch_operands = 0 : i64, tpu.core_type = #tpu.core_type<tc>, window_params = [{transform_indices = @transform_0, window_bounds = array<i64: 2, 8, 256>}, {pipeline_mode = #tpu.pipeline_mode<synchronous>, transform_indices = @transform_1, window_bounds = array<i64: 8, 72>}, {pipeline_mode = #tpu.pipeline_mode<synchronous>, transform_indices = @transform_2, window_bounds = array<i64: 8, 72>}, {transform_indices = @transform_3, window_bounds = array<i64: 2, 8, 256>}]} {
    %0 = tpu.iota {dimensions = array<i32: 1>} : vector<8x256xi32>
    %c15_i32 = arith.constant 15 : i32
    %1 = vector.broadcast %c15_i32 : i32 to vector<8x256xi32>
    %2 = arith.andi %0, %1 : vector<8x256xi32>
    %c16_i32 = arith.constant 16 : i32
    %3 = vector.broadcast %c16_i32 : i32 to vector<8x256xi32>
    %4 = arith.cmpi slt, %0, %3 : vector<8x256xi32>
    %c240_i32 = arith.constant 240 : i32
    %5 = vector.broadcast %c240_i32 : i32 to vector<8x256xi32>
    %6 = arith.cmpi sge, %0, %5 : vector<8x256xi32>
    %c0_i32 = arith.constant 0 : i32
    %7 = vector.broadcast %c0_i32 : i32 to vector<8x256xi32>
    %8 = arith.cmpi eq, %2, %7 : vector<8x256xi32>
    %c15_i32_0 = arith.constant 15 : i32
    %9 = vector.broadcast %c15_i32_0 : i32 to vector<8x256xi32>
    %10 = arith.cmpi eq, %2, %9 : vector<8x256xi32>
    %c16_i32_1 = arith.constant 16 : i32
    %11 = vector.broadcast %c16_i32_1 : i32 to vector<8x256xi32>
    %12 = arith.addi %0, %11 : vector<8x256xi32>
    %c16_i32_2 = arith.constant 16 : i32
    %13 = vector.broadcast %c16_i32_2 : i32 to vector<8x256xi32>
    %14 = arith.subi %0, %13 : vector<8x256xi32>
    %15 = arith.select %4, %12, %14 : vector<8x256xi1>, vector<8x256xi32>
    %c16_i32_3 = arith.constant 16 : i32
    %16 = vector.broadcast %c16_i32_3 : i32 to vector<8x256xi32>
    %17 = arith.subi %0, %16 : vector<8x256xi32>
    %c16_i32_4 = arith.constant 16 : i32
    %18 = vector.broadcast %c16_i32_4 : i32 to vector<8x256xi32>
    %19 = arith.addi %0, %18 : vector<8x256xi32>
    %20 = arith.select %6, %17, %19 : vector<8x256xi1>, vector<8x256xi32>
    %c1_i32 = arith.constant 1 : i32
    %21 = vector.broadcast %c1_i32 : i32 to vector<8x256xi32>
    %22 = arith.addi %0, %21 : vector<8x256xi32>
    %c1_i32_5 = arith.constant 1 : i32
    %23 = vector.broadcast %c1_i32_5 : i32 to vector<8x256xi32>
    %24 = arith.subi %0, %23 : vector<8x256xi32>
    %25 = arith.select %8, %22, %24 : vector<8x256xi1>, vector<8x256xi32>
    %c1_i32_6 = arith.constant 1 : i32
    %26 = vector.broadcast %c1_i32_6 : i32 to vector<8x256xi32>
    %27 = arith.subi %0, %26 : vector<8x256xi32>
    %c1_i32_7 = arith.constant 1 : i32
    %28 = vector.broadcast %c1_i32_7 : i32 to vector<8x256xi32>
    %29 = arith.addi %0, %28 : vector<8x256xi32>
    %30 = arith.select %10, %27, %29 : vector<8x256xi1>, vector<8x256xi32>
    %c16_i32_8 = arith.constant 16 : i32
    %31 = tpu.dynamic_rotate %0 by %c16_i32_8 dim 1 : vector<8x256xi32>, i32 -> vector<8x256xi32>
    %c1_i32_9 = arith.constant 1 : i32
    %32 = tpu.dynamic_rotate %0 by %c1_i32_9 dim 1 : vector<8x256xi32>, i32 -> vector<8x256xi32>
    %33 = arith.cmpi eq, %31, %15 : vector<8x256xi32>
    %34 = arith.cmpi eq, %31, %20 : vector<8x256xi32>
    %35 = arith.cmpi eq, %32, %25 : vector<8x256xi32>
    %36 = arith.cmpi eq, %32, %30 : vector<8x256xi32>
    %c0 = arith.constant 0 : index
    %c0_10 = arith.constant 0 : index
    %c0_11 = arith.constant 0 : index
    %37 = vector.load %arg1[%c0, %c0_10, %c0_11] : memref<2x8x256xf32, #tpu.memory_space<vmem>>, vector<1x8x256xf32>
    %38 = vector.shape_cast %37 : vector<1x8x256xf32> to vector<8x256xf32>
    %c16_i32_12 = arith.constant 16 : i32
    %39 = tpu.dynamic_rotate %38 by %c16_i32_12 dim 1 : vector<8x256xf32>, i32 -> vector<8x256xf32>
    %c240_i32_13 = arith.constant 240 : i32
    %40 = tpu.dynamic_rotate %38 by %c240_i32_13 dim 1 : vector<8x256xf32>, i32 -> vector<8x256xf32>
    %41 = arith.select %33, %39, %40 : vector<8x256xi1>, vector<8x256xf32>
    %42 = arith.select %34, %39, %40 : vector<8x256xi1>, vector<8x256xf32>
    %c1_i32_14 = arith.constant 1 : i32
    %43 = tpu.dynamic_rotate %41 by %c1_i32_14 dim 1 : vector<8x256xf32>, i32 -> vector<8x256xf32>
    %c255_i32 = arith.constant 255 : i32
    %44 = tpu.dynamic_rotate %41 by %c255_i32 dim 1 : vector<8x256xf32>, i32 -> vector<8x256xf32>
    %45 = arith.select %35, %43, %44 : vector<8x256xi1>, vector<8x256xf32>
    %46 = arith.select %36, %43, %44 : vector<8x256xi1>, vector<8x256xf32>
    %47 = tpu.concatenate %45, %41, %46 in 0 : vector<8x256xf32>, vector<8x256xf32>, vector<8x256xf32> -> vector<24x256xf32>
    %c0_15 = arith.constant 0 : index
    %c0_16 = arith.constant 0 : index
    %48 = vector.load %arg2[%c0_15, %c0_16] : memref<8x72xf32, #tpu.memory_space<vmem>>, vector<8x24xf32>
    %cst = arith.constant dense<0.000000e+00> : vector<8x256xf32>
    %49 = tpu.matmul %48, %47, %cst {dimension_numbers = #tpu.dot_dimension_numbers<[1], [0], [0], [1], [0, 0, 1, 1], [], []>} : vector<8x24xf32>, vector<24x256xf32>, vector<8x256xf32> -> vector<8x256xf32>
    %c1_i32_17 = arith.constant 1 : i32
    %50 = tpu.dynamic_rotate %38 by %c1_i32_17 dim 1 : vector<8x256xf32>, i32 -> vector<8x256xf32>
    %c255_i32_18 = arith.constant 255 : i32
    %51 = tpu.dynamic_rotate %38 by %c255_i32_18 dim 1 : vector<8x256xf32>, i32 -> vector<8x256xf32>
    %52 = arith.select %35, %50, %51 : vector<8x256xi1>, vector<8x256xf32>
    %53 = arith.select %36, %50, %51 : vector<8x256xi1>, vector<8x256xf32>
    %54 = tpu.concatenate %52, %38, %53 in 0 : vector<8x256xf32>, vector<8x256xf32>, vector<8x256xf32> -> vector<24x256xf32>
    %c0_19 = arith.constant 0 : index
    %c24 = arith.constant 24 : index
    %55 = vector.load %arg2[%c0_19, %c24] : memref<8x72xf32, #tpu.memory_space<vmem>>, vector<8x24xf32>
    %cst_20 = arith.constant dense<0.000000e+00> : vector<8x256xf32>
    %56 = tpu.matmul %55, %54, %cst_20 {dimension_numbers = #tpu.dot_dimension_numbers<[1], [0], [0], [1], [0, 0, 1, 1], [], []>} : vector<8x24xf32>, vector<24x256xf32>, vector<8x256xf32> -> vector<8x256xf32>
    %57 = arith.addf %49, %56 : vector<8x256xf32>
    %c1_i32_21 = arith.constant 1 : i32
    %58 = tpu.dynamic_rotate %42 by %c1_i32_21 dim 1 : vector<8x256xf32>, i32 -> vector<8x256xf32>
    %c255_i32_22 = arith.constant 255 : i32
    %59 = tpu.dynamic_rotate %42 by %c255_i32_22 dim 1 : vector<8x256xf32>, i32 -> vector<8x256xf32>
    %60 = arith.select %35, %58, %59 : vector<8x256xi1>, vector<8x256xf32>
    %61 = arith.select %36, %58, %59 : vector<8x256xi1>, vector<8x256xf32>
    %62 = tpu.concatenate %60, %42, %61 in 0 : vector<8x256xf32>, vector<8x256xf32>, vector<8x256xf32> -> vector<24x256xf32>
    %c0_23 = arith.constant 0 : index
    %c48 = arith.constant 48 : index
    %63 = vector.load %arg2[%c0_23, %c48] : memref<8x72xf32, #tpu.memory_space<vmem>>, vector<8x24xf32>
    %cst_24 = arith.constant dense<0.000000e+00> : vector<8x256xf32>
    %64 = tpu.matmul %63, %62, %cst_24 {dimension_numbers = #tpu.dot_dimension_numbers<[1], [0], [0], [1], [0, 0, 1, 1], [], []>} : vector<8x24xf32>, vector<24x256xf32>, vector<8x256xf32> -> vector<8x256xf32>
    %65 = arith.addf %57, %64 : vector<8x256xf32>
    %cst_25 = arith.constant dense<0.000000e+00> : vector<8xf32>
    %66 = vector.multi_reduction <add>, %65, %cst_25 [1] : vector<8x256xf32> to vector<8xf32>
    %67 = vector.shape_cast %66 : vector<8xf32> to vector<8x1xf32>
    %cst_26 = arith.constant 3.906250e-03 : f32
    %68 = vector.broadcast %cst_26 : f32 to vector<8x1xf32>
    %69 = arith.mulf %67, %68 : vector<8x1xf32>
    %70 = vector.broadcast %69 : vector<8x1xf32> to vector<8x256xf32>
    %71 = arith.subf %65, %70 : vector<8x256xf32>
    %72 = arith.mulf %71, %71 : vector<8x256xf32>
    %cst_27 = arith.constant dense<0.000000e+00> : vector<8xf32>
    %73 = vector.multi_reduction <add>, %72, %cst_27 [1] : vector<8x256xf32> to vector<8xf32>
    %74 = vector.shape_cast %73 : vector<8xf32> to vector<8x1xf32>
    %cst_28 = arith.constant 3.906250e-03 : f32
    %75 = vector.broadcast %cst_28 : f32 to vector<8x1xf32>
    %76 = arith.mulf %74, %75 : vector<8x1xf32>
    %cst_29 = arith.constant 9.99999974E-6 : f32
    %77 = vector.broadcast %cst_29 : f32 to vector<8x1xf32>
    %78 = arith.addf %76, %77 : vector<8x1xf32>
    %79 = math.rsqrt %78 : vector<8x1xf32>
    %80 = vector.broadcast %79 : vector<8x1xf32> to vector<8x256xf32>
    %81 = arith.mulf %71, %80 : vector<8x256xf32>
    %cst_30 = arith.constant 0.000000e+00 : f32
    %82 = vector.broadcast %cst_30 : f32 to vector<8x256xf32>
    %83 = arith.maximumf %81, %82 : vector<8x256xf32>
    %c16_i32_31 = arith.constant 16 : i32
    %84 = tpu.dynamic_rotate %83 by %c16_i32_31 dim 1 : vector<8x256xf32>, i32 -> vector<8x256xf32>
    %c240_i32_32 = arith.constant 240 : i32
    %85 = tpu.dynamic_rotate %83 by %c240_i32_32 dim 1 : vector<8x256xf32>, i32 -> vector<8x256xf32>
    %86 = arith.select %33, %84, %85 : vector<8x256xi1>, vector<8x256xf32>
    %87 = arith.select %34, %84, %85 : vector<8x256xi1>, vector<8x256xf32>
    %c1_i32_33 = arith.constant 1 : i32
    %88 = tpu.dynamic_rotate %86 by %c1_i32_33 dim 1 : vector<8x256xf32>, i32 -> vector<8x256xf32>
    %c255_i32_34 = arith.constant 255 : i32
    %89 = tpu.dynamic_rotate %86 by %c255_i32_34 dim 1 : vector<8x256xf32>, i32 -> vector<8x256xf32>
    %90 = arith.select %35, %88, %89 : vector<8x256xi1>, vector<8x256xf32>
    %91 = arith.select %36, %88, %89 : vector<8x256xi1>, vector<8x256xf32>
    %92 = tpu.concatenate %90, %86, %91 in 0 : vector<8x256xf32>, vector<8x256xf32>, vector<8x256xf32> -> vector<24x256xf32>
    %c0_35 = arith.constant 0 : index
    %c0_36 = arith.constant 0 : index
    %93 = vector.load %arg3[%c0_35, %c0_36] : memref<8x72xf32, #tpu.memory_space<vmem>>, vector<8x24xf32>
    %cst_37 = arith.constant dense<0.000000e+00> : vector<8x256xf32>
    %94 = tpu.matmul %93, %92, %cst_37 {dimension_numbers = #tpu.dot_dimension_numbers<[1], [0], [0], [1], [0, 0, 1, 1], [], []>} : vector<8x24xf32>, vector<24x256xf32>, vector<8x256xf32> -> vector<8x256xf32>
    %c1_i32_38 = arith.constant 1 : i32
    %95 = tpu.dynamic_rotate %83 by %c1_i32_38 dim 1 : vector<8x256xf32>, i32 -> vector<8x256xf32>
    %c255_i32_39 = arith.constant 255 : i32
    %96 = tpu.dynamic_rotate %83 by %c255_i32_39 dim 1 : vector<8x256xf32>, i32 -> vector<8x256xf32>
    %97 = arith.select %35, %95, %96 : vector<8x256xi1>, vector<8x256xf32>
    %98 = arith.select %36, %95, %96 : vector<8x256xi1>, vector<8x256xf32>
    %99 = tpu.concatenate %97, %83, %98 in 0 : vector<8x256xf32>, vector<8x256xf32>, vector<8x256xf32> -> vector<24x256xf32>
    %c0_40 = arith.constant 0 : index
    %c24_41 = arith.constant 24 : index
    %100 = vector.load %arg3[%c0_40, %c24_41] : memref<8x72xf32, #tpu.memory_space<vmem>>, vector<8x24xf32>
    %cst_42 = arith.constant dense<0.000000e+00> : vector<8x256xf32>
    %101 = tpu.matmul %100, %99, %cst_42 {dimension_numbers = #tpu.dot_dimension_numbers<[1], [0], [0], [1], [0, 0, 1, 1], [], []>} : vector<8x24xf32>, vector<24x256xf32>, vector<8x256xf32> -> vector<8x256xf32>
    %102 = arith.addf %94, %101 : vector<8x256xf32>
    %c1_i32_43 = arith.constant 1 : i32
    %103 = tpu.dynamic_rotate %87 by %c1_i32_43 dim 1 : vector<8x256xf32>, i32 -> vector<8x256xf32>
    %c255_i32_44 = arith.constant 255 : i32
    %104 = tpu.dynamic_rotate %87 by %c255_i32_44 dim 1 : vector<8x256xf32>, i32 -> vector<8x256xf32>
    %105 = arith.select %35, %103, %104 : vector<8x256xi1>, vector<8x256xf32>
    %106 = arith.select %36, %103, %104 : vector<8x256xi1>, vector<8x256xf32>
    %107 = tpu.concatenate %105, %87, %106 in 0 : vector<8x256xf32>, vector<8x256xf32>, vector<8x256xf32> -> vector<24x256xf32>
    %c0_45 = arith.constant 0 : index
    %c48_46 = arith.constant 48 : index
    %108 = vector.load %arg3[%c0_45, %c48_46] : memref<8x72xf32, #tpu.memory_space<vmem>>, vector<8x24xf32>
    %cst_47 = arith.constant dense<0.000000e+00> : vector<8x256xf32>
    %109 = tpu.matmul %108, %107, %cst_47 {dimension_numbers = #tpu.dot_dimension_numbers<[1], [0], [0], [1], [0, 0, 1, 1], [], []>} : vector<8x24xf32>, vector<24x256xf32>, vector<8x256xf32> -> vector<8x256xf32>
    %110 = arith.addf %102, %109 : vector<8x256xf32>
    %cst_48 = arith.constant dense<0.000000e+00> : vector<8xf32>
    %111 = vector.multi_reduction <add>, %110, %cst_48 [1] : vector<8x256xf32> to vector<8xf32>
    %112 = vector.shape_cast %111 : vector<8xf32> to vector<8x1xf32>
    %cst_49 = arith.constant 3.906250e-03 : f32
    %113 = vector.broadcast %cst_49 : f32 to vector<8x1xf32>
    %114 = arith.mulf %112, %113 : vector<8x1xf32>
    %115 = vector.broadcast %114 : vector<8x1xf32> to vector<8x256xf32>
    %116 = arith.subf %110, %115 : vector<8x256xf32>
    %117 = arith.mulf %116, %116 : vector<8x256xf32>
    %cst_50 = arith.constant dense<0.000000e+00> : vector<8xf32>
    %118 = vector.multi_reduction <add>, %117, %cst_50 [1] : vector<8x256xf32> to vector<8xf32>
    %119 = vector.shape_cast %118 : vector<8xf32> to vector<8x1xf32>
    %cst_51 = arith.constant 3.906250e-03 : f32
    %120 = vector.broadcast %cst_51 : f32 to vector<8x1xf32>
    %121 = arith.mulf %119, %120 : vector<8x1xf32>
    %cst_52 = arith.constant 9.99999974E-6 : f32
    %122 = vector.broadcast %cst_52 : f32 to vector<8x1xf32>
    %123 = arith.addf %121, %122 : vector<8x1xf32>
    %124 = math.rsqrt %123 : vector<8x1xf32>
    %125 = vector.broadcast %124 : vector<8x1xf32> to vector<8x256xf32>
    %126 = arith.mulf %116, %125 : vector<8x256xf32>
    %127 = arith.addf %38, %126 : vector<8x256xf32>
    %c0_53 = arith.constant 0 : index
    %c0_54 = arith.constant 0 : index
    %c0_55 = arith.constant 0 : index
    %128 = vector.load %arg4[%c0_53, %c0_54, %c0_55] : memref<2x8x256xf32, #tpu.memory_space<vmem>>, vector<1x8x256xf32>
    %129 = vector.shape_cast %128 : vector<1x8x256xf32> to vector<8x256xf32>
    %130 = vector.shape_cast %127 : vector<8x256xf32> to vector<1x8x256xf32>
    tpu.vector_store %arg4[%c0_53, %c0_54, %c0_55], %130 {strides = array<i32>} : memref<2x8x256xf32, #tpu.memory_space<vmem>>, vector<1x8x256xf32>,
    %c1 = arith.constant 1 : index
    %c0_56 = arith.constant 0 : index
    %c0_57 = arith.constant 0 : index
    %131 = vector.load %arg1[%c1, %c0_56, %c0_57] : memref<2x8x256xf32, #tpu.memory_space<vmem>>, vector<1x8x256xf32>
    %132 = vector.shape_cast %131 : vector<1x8x256xf32> to vector<8x256xf32>
    %c16_i32_58 = arith.constant 16 : i32
    %133 = tpu.dynamic_rotate %132 by %c16_i32_58 dim 1 : vector<8x256xf32>, i32 -> vector<8x256xf32>
    %c240_i32_59 = arith.constant 240 : i32
    %134 = tpu.dynamic_rotate %132 by %c240_i32_59 dim 1 : vector<8x256xf32>, i32 -> vector<8x256xf32>
    %135 = arith.select %33, %133, %134 : vector<8x256xi1>, vector<8x256xf32>
    %136 = arith.select %34, %133, %134 : vector<8x256xi1>, vector<8x256xf32>
    %c1_i32_60 = arith.constant 1 : i32
    %137 = tpu.dynamic_rotate %135 by %c1_i32_60 dim 1 : vector<8x256xf32>, i32 -> vector<8x256xf32>
    %c255_i32_61 = arith.constant 255 : i32
    %138 = tpu.dynamic_rotate %135 by %c255_i32_61 dim 1 : vector<8x256xf32>, i32 -> vector<8x256xf32>
    %139 = arith.select %35, %137, %138 : vector<8x256xi1>, vector<8x256xf32>
    %140 = arith.select %36, %137, %138 : vector<8x256xi1>, vector<8x256xf32>
    %141 = tpu.concatenate %139, %135, %140 in 0 : vector<8x256xf32>, vector<8x256xf32>, vector<8x256xf32> -> vector<24x256xf32>
    %c0_62 = arith.constant 0 : index
    %c0_63 = arith.constant 0 : index
    %142 = vector.load %arg2[%c0_62, %c0_63] : memref<8x72xf32, #tpu.memory_space<vmem>>, vector<8x24xf32>
    %cst_64 = arith.constant dense<0.000000e+00> : vector<8x256xf32>
    %143 = tpu.matmul %142, %141, %cst_64 {dimension_numbers = #tpu.dot_dimension_numbers<[1], [0], [0], [1], [0, 0, 1, 1], [], []>} : vector<8x24xf32>, vector<24x256xf32>, vector<8x256xf32> -> vector<8x256xf32>
    %c1_i32_65 = arith.constant 1 : i32
    %144 = tpu.dynamic_rotate %132 by %c1_i32_65 dim 1 : vector<8x256xf32>, i32 -> vector<8x256xf32>
    %c255_i32_66 = arith.constant 255 : i32
    %145 = tpu.dynamic_rotate %132 by %c255_i32_66 dim 1 : vector<8x256xf32>, i32 -> vector<8x256xf32>
    %146 = arith.select %35, %144, %145 : vector<8x256xi1>, vector<8x256xf32>
    %147 = arith.select %36, %144, %145 : vector<8x256xi1>, vector<8x256xf32>
    %148 = tpu.concatenate %146, %132, %147 in 0 : vector<8x256xf32>, vector<8x256xf32>, vector<8x256xf32> -> vector<24x256xf32>
    %c0_67 = arith.constant 0 : index
    %c24_68 = arith.constant 24 : index
    %149 = vector.load %arg2[%c0_67, %c24_68] : memref<8x72xf32, #tpu.memory_space<vmem>>, vector<8x24xf32>
    %cst_69 = arith.constant dense<0.000000e+00> : vector<8x256xf32>
    %150 = tpu.matmul %149, %148, %cst_69 {dimension_numbers = #tpu.dot_dimension_numbers<[1], [0], [0], [1], [0, 0, 1, 1], [], []>} : vector<8x24xf32>, vector<24x256xf32>, vector<8x256xf32> -> vector<8x256xf32>
    %151 = arith.addf %143, %150 : vector<8x256xf32>
    %c1_i32_70 = arith.constant 1 : i32
    %152 = tpu.dynamic_rotate %136 by %c1_i32_70 dim 1 : vector<8x256xf32>, i32 -> vector<8x256xf32>
    %c255_i32_71 = arith.constant 255 : i32
    %153 = tpu.dynamic_rotate %136 by %c255_i32_71 dim 1 : vector<8x256xf32>, i32 -> vector<8x256xf32>
    %154 = arith.select %35, %152, %153 : vector<8x256xi1>, vector<8x256xf32>
    %155 = arith.select %36, %152, %153 : vector<8x256xi1>, vector<8x256xf32>
    %156 = tpu.concatenate %154, %136, %155 in 0 : vector<8x256xf32>, vector<8x256xf32>, vector<8x256xf32> -> vector<24x256xf32>
    %c0_72 = arith.constant 0 : index
    %c48_73 = arith.constant 48 : index
    %157 = vector.load %arg2[%c0_72, %c48_73] : memref<8x72xf32, #tpu.memory_space<vmem>>, vector<8x24xf32>
    %cst_74 = arith.constant dense<0.000000e+00> : vector<8x256xf32>
    %158 = tpu.matmul %157, %156, %cst_74 {dimension_numbers = #tpu.dot_dimension_numbers<[1], [0], [0], [1], [0, 0, 1, 1], [], []>} : vector<8x24xf32>, vector<24x256xf32>, vector<8x256xf32> -> vector<8x256xf32>
    %159 = arith.addf %151, %158 : vector<8x256xf32>
    %cst_75 = arith.constant dense<0.000000e+00> : vector<8xf32>
    %160 = vector.multi_reduction <add>, %159, %cst_75 [1] : vector<8x256xf32> to vector<8xf32>
    %161 = vector.shape_cast %160 : vector<8xf32> to vector<8x1xf32>
    %cst_76 = arith.constant 3.906250e-03 : f32
    %162 = vector.broadcast %cst_76 : f32 to vector<8x1xf32>
    %163 = arith.mulf %161, %162 : vector<8x1xf32>
    %164 = vector.broadcast %163 : vector<8x1xf32> to vector<8x256xf32>
    %165 = arith.subf %159, %164 : vector<8x256xf32>
    %166 = arith.mulf %165, %165 : vector<8x256xf32>
    %cst_77 = arith.constant dense<0.000000e+00> : vector<8xf32>
    %167 = vector.multi_reduction <add>, %166, %cst_77 [1] : vector<8x256xf32> to vector<8xf32>
    %168 = vector.shape_cast %167 : vector<8xf32> to vector<8x1xf32>
    %cst_78 = arith.constant 3.906250e-03 : f32
    %169 = vector.broadcast %cst_78 : f32 to vector<8x1xf32>
    %170 = arith.mulf %168, %169 : vector<8x1xf32>
    %cst_79 = arith.constant 9.99999974E-6 : f32
    %171 = vector.broadcast %cst_79 : f32 to vector<8x1xf32>
    %172 = arith.addf %170, %171 : vector<8x1xf32>
    %173 = math.rsqrt %172 : vector<8x1xf32>
    %174 = vector.broadcast %173 : vector<8x1xf32> to vector<8x256xf32>
    %175 = arith.mulf %165, %174 : vector<8x256xf32>
    %cst_80 = arith.constant 0.000000e+00 : f32
    %176 = vector.broadcast %cst_80 : f32 to vector<8x256xf32>
    %177 = arith.maximumf %175, %176 : vector<8x256xf32>
    %c16_i32_81 = arith.constant 16 : i32
    %178 = tpu.dynamic_rotate %177 by %c16_i32_81 dim 1 : vector<8x256xf32>, i32 -> vector<8x256xf32>
    %c240_i32_82 = arith.constant 240 : i32
    %179 = tpu.dynamic_rotate %177 by %c240_i32_82 dim 1 : vector<8x256xf32>, i32 -> vector<8x256xf32>
    %180 = arith.select %33, %178, %179 : vector<8x256xi1>, vector<8x256xf32>
    %181 = arith.select %34, %178, %179 : vector<8x256xi1>, vector<8x256xf32>
    %c1_i32_83 = arith.constant 1 : i32
    %182 = tpu.dynamic_rotate %180 by %c1_i32_83 dim 1 : vector<8x256xf32>, i32 -> vector<8x256xf32>
    %c255_i32_84 = arith.constant 255 : i32
    %183 = tpu.dynamic_rotate %180 by %c255_i32_84 dim 1 : vector<8x256xf32>, i32 -> vector<8x256xf32>
    %184 = arith.select %35, %182, %183 : vector<8x256xi1>, vector<8x256xf32>
    %185 = arith.select %36, %182, %183 : vector<8x256xi1>, vector<8x256xf32>
    %186 = tpu.concatenate %184, %180, %185 in 0 : vector<8x256xf32>, vector<8x256xf32>, vector<8x256xf32> -> vector<24x256xf32>
    %c0_85 = arith.constant 0 : index
    %c0_86 = arith.constant 0 : index
    %187 = vector.load %arg3[%c0_85, %c0_86] : memref<8x72xf32, #tpu.memory_space<vmem>>, vector<8x24xf32>
    %cst_87 = arith.constant dense<0.000000e+00> : vector<8x256xf32>
    %188 = tpu.matmul %187, %186, %cst_87 {dimension_numbers = #tpu.dot_dimension_numbers<[1], [0], [0], [1], [0, 0, 1, 1], [], []>} : vector<8x24xf32>, vector<24x256xf32>, vector<8x256xf32> -> vector<8x256xf32>
    %c1_i32_88 = arith.constant 1 : i32
    %189 = tpu.dynamic_rotate %177 by %c1_i32_88 dim 1 : vector<8x256xf32>, i32 -> vector<8x256xf32>
    %c255_i32_89 = arith.constant 255 : i32
    %190 = tpu.dynamic_rotate %177 by %c255_i32_89 dim 1 : vector<8x256xf32>, i32 -> vector<8x256xf32>
    %191 = arith.select %35, %189, %190 : vector<8x256xi1>, vector<8x256xf32>
    %192 = arith.select %36, %189, %190 : vector<8x256xi1>, vector<8x256xf32>
    %193 = tpu.concatenate %191, %177, %192 in 0 : vector<8x256xf32>, vector<8x256xf32>, vector<8x256xf32> -> vector<24x256xf32>
    %c0_90 = arith.constant 0 : index
    %c24_91 = arith.constant 24 : index
    %194 = vector.load %arg3[%c0_90, %c24_91] : memref<8x72xf32, #tpu.memory_space<vmem>>, vector<8x24xf32>
    %cst_92 = arith.constant dense<0.000000e+00> : vector<8x256xf32>
    %195 = tpu.matmul %194, %193, %cst_92 {dimension_numbers = #tpu.dot_dimension_numbers<[1], [0], [0], [1], [0, 0, 1, 1], [], []>} : vector<8x24xf32>, vector<24x256xf32>, vector<8x256xf32> -> vector<8x256xf32>
    %196 = arith.addf %188, %195 : vector<8x256xf32>
    %c1_i32_93 = arith.constant 1 : i32
    %197 = tpu.dynamic_rotate %181 by %c1_i32_93 dim 1 : vector<8x256xf32>, i32 -> vector<8x256xf32>
    %c255_i32_94 = arith.constant 255 : i32
    %198 = tpu.dynamic_rotate %181 by %c255_i32_94 dim 1 : vector<8x256xf32>, i32 -> vector<8x256xf32>
    %199 = arith.select %35, %197, %198 : vector<8x256xi1>, vector<8x256xf32>
    %200 = arith.select %36, %197, %198 : vector<8x256xi1>, vector<8x256xf32>
    %201 = tpu.concatenate %199, %181, %200 in 0 : vector<8x256xf32>, vector<8x256xf32>, vector<8x256xf32> -> vector<24x256xf32>
    %c0_95 = arith.constant 0 : index
    %c48_96 = arith.constant 48 : index
    %202 = vector.load %arg3[%c0_95, %c48_96] : memref<8x72xf32, #tpu.memory_space<vmem>>, vector<8x24xf32>
    %cst_97 = arith.constant dense<0.000000e+00> : vector<8x256xf32>
    %203 = tpu.matmul %202, %201, %cst_97 {dimension_numbers = #tpu.dot_dimension_numbers<[1], [0], [0], [1], [0, 0, 1, 1], [], []>} : vector<8x24xf32>, vector<24x256xf32>, vector<8x256xf32> -> vector<8x256xf32>
    %204 = arith.addf %196, %203 : vector<8x256xf32>
    %cst_98 = arith.constant dense<0.000000e+00> : vector<8xf32>
    %205 = vector.multi_reduction <add>, %204, %cst_98 [1] : vector<8x256xf32> to vector<8xf32>
    %206 = vector.shape_cast %205 : vector<8xf32> to vector<8x1xf32>
    %cst_99 = arith.constant 3.906250e-03 : f32
    %207 = vector.broadcast %cst_99 : f32 to vector<8x1xf32>
    %208 = arith.mulf %206, %207 : vector<8x1xf32>
    %209 = vector.broadcast %208 : vector<8x1xf32> to vector<8x256xf32>
    %210 = arith.subf %204, %209 : vector<8x256xf32>
    %211 = arith.mulf %210, %210 : vector<8x256xf32>
    %cst_100 = arith.constant dense<0.000000e+00> : vector<8xf32>
    %212 = vector.multi_reduction <add>, %211, %cst_100 [1] : vector<8x256xf32> to vector<8xf32>
    %213 = vector.shape_cast %212 : vector<8xf32> to vector<8x1xf32>
    %cst_101 = arith.constant 3.906250e-03 : f32
    %214 = vector.broadcast %cst_101 : f32 to vector<8x1xf32>
    %215 = arith.mulf %213, %214 : vector<8x1xf32>
    %cst_102 = arith.constant 9.99999974E-6 : f32
    %216 = vector.broadcast %cst_102 : f32 to vector<8x1xf32>
    %217 = arith.addf %215, %216 : vector<8x1xf32>
    %218 = math.rsqrt %217 : vector<8x1xf32>
    %219 = vector.broadcast %218 : vector<8x1xf32> to vector<8x256xf32>
    %220 = arith.mulf %210, %219 : vector<8x256xf32>
    %221 = arith.addf %132, %220 : vector<8x256xf32>
    %c1_103 = arith.constant 1 : index
    %c0_104 = arith.constant 0 : index
    %c0_105 = arith.constant 0 : index
    %222 = vector.load %arg4[%c1_103, %c0_104, %c0_105] : memref<2x8x256xf32, #tpu.memory_space<vmem>>, vector<1x8x256xf32>
    %223 = vector.shape_cast %222 : vector<1x8x256xf32> to vector<8x256xf32>
    %224 = vector.shape_cast %221 : vector<8x256xf32> to vector<1x8x256xf32>
    tpu.vector_store %arg4[%c1_103, %c0_104, %c0_105], %224 {strides = array<i32>} : memref<2x8x256xf32, #tpu.memory_space<vmem>>, vector<1x8x256xf32>,
    return
  }
  func.func @transform_0(%arg0: i32) -> (i32, i32, i32) {
    %c0_i32 = arith.constant 0 : i32
    %c0_i32_0 = arith.constant 0 : i32
    %c0_i32_1 = arith.constant 0 : i32
    return %arg0, %c0_i32, %c0_i32_0 : i32, i32, i32
  }
  func.func @transform_1(%arg0: i32) -> (i32, i32) {
    %c0_i32 = arith.constant 0 : i32
    %c0_i32_0 = arith.constant 0 : i32
    %c0_i32_1 = arith.constant 0 : i32
    return %c0_i32, %c0_i32_0 : i32, i32
  }
  func.func @transform_2(%arg0: i32) -> (i32, i32) {
    %c0_i32 = arith.constant 0 : i32
    %c0_i32_0 = arith.constant 0 : i32
    %c0_i32_1 = arith.constant 0 : i32
    return %c0_i32, %c0_i32_0 : i32, i32
  }
  func.func @transform_3(%arg0: i32) -> (i32, i32, i32) {
    %c0_i32 = arith.constant 0 : i32
    %c0_i32_0 = arith.constant 0 : i32
    %c0_i32_1 = arith.constant 0 : i32
    return %arg0, %c0_i32, %c0_i32_0 : i32, i32, i32
  }
}

</mosaic_0001>

<llo_original>
// kernel: tpu_custom_call.1
$region0: #{tpu_custom_call.1}
  #allocation0 [shape = 'u32[]', space=smem, size = 0x4, offset = 0x4, fixed_abs, tag = 'smem constant byte address 0x4 - core index']
  #allocation1 [shape = 'u32[144,128]{1,0:T(1,128)}', space=vmem, size = 0x12000, scoped, tag = 'internal scratch']
  %s0 = inlined_call_operand.hbm [shape: f32[2,8,256], index: 0, kind: input, shape index: {}]
  %s1 = inlined_call_operand.hbm [shape: f32[8,72], index: 1, kind: input, shape index: {}]
  %s2 = inlined_call_operand.hbm [shape: f32[8,72], index: 2, kind: input, shape index: {}]
  %s3 = inlined_call_operand.hbm [shape: f32[2,8,256], index: 3, kind: output, shape index: {}]
  %s4 = sld [smem:[#allocation0]]
  $region34: #{tpu_custom_call.1} parent=0
    _
  %s6 = ssub.s32 1, %s4
  %s7 = scalar_select 0, %s6, %s4
  $region1: #{tpu_custom_call.1} parent=0
    #allocation2 [shape = 'u8[16384]{0}', space=vmem, size = 0x4000, scoped, tag = 'input window, operand 0, single buffered']
    #allocation3 [shape = 's32[1]{0}', space=sflag, size = 0x4, scoped, tag = 'scoped memory for tpu_custom_call.1']
    #allocation4 [shape = 's32[1]{0}', space=sflag, size = 0x4, scoped, tag = 'scoped memory for tpu_custom_call.1']
    #allocation5 [shape = 'u8[4096]{0}', space=vmem, size = 0x1000, scoped, tag = 'input window, operand 1, single buffered']
    #allocation6 [shape = 's32[1]{0}', space=sflag, size = 0x4, scoped, tag = 'scoped memory for tpu_custom_call.1']
    #allocation7 [shape = 'u8[4096]{0}', space=vmem, size = 0x1000, scoped, tag = 'input window, operand 2, single buffered']
    #allocation8 [shape = 'u8[16384]{0}', space=vmem, size = 0x4000, scoped, tag = 'output window, operand 0, single buffered']
    %8 = vsyncpa [#allocation3], 0
    %9 = vsyncpa [#allocation6], 0
    %10 = vsyncpa [#allocation4], 0
    // Predicated region
    $region2: #{tpu_custom_call.1} parent=1 // pred_check
      _
    $region3: #{tpu_custom_call.1} parent=1 // pred_check_branch
      %12 = sbr.rel (0) target = $region5
    $region4: #{tpu_custom_call.1} parent=1 // pred_region
      %s14 = ssub.s32 512, 512
      %15 = vsyncadd [#allocation3], %s14
      %s16 = sshll.u32 [#allocation2], 4
      %s17 = int_to_ptr.vmem [resolvable:$true] %s16
      %22 = dma.hbm_to_vmem [thread:$0]  %s0, 512, %s17, [#allocation3], 256, 256, 16
    $region5: #{tpu_custom_call.1} parent=1 // pred_fallthru
      _
    // Predicated region
    $region6: #{tpu_custom_call.1} parent=1 // pred_check
      _
    $region7: #{tpu_custom_call.1} parent=1 // pred_check_branch
      %24 = sbr.rel (0) target = $region9
    $region8: #{tpu_custom_call.1} parent=1 // pred_region
      %s26 = ssub.s32 128, 128
      %27 = vsyncadd [#allocation6], %s26
      %s29 = sshll.u32 [#allocation5], 4
      %s30 = int_to_ptr.vmem [resolvable:$true] %s29
      %32 = dma.hbm_to_vmem [thread:$0]  %s1, 128, %s30, [#allocation6]
    $region9: #{tpu_custom_call.1} parent=1 // pred_fallthru
      _
    // Predicated region
    $region10: #{tpu_custom_call.1} parent=1 // pred_check
      _
    $region11: #{tpu_custom_call.1} parent=1 // pred_check_branch
      %34 = sbr.rel (0) target = $region13
    $region12: #{tpu_custom_call.1} parent=1 // pred_region
      %s36 = ssub.s32 128, 128
      %37 = vsyncadd [#allocation6], %s36
      %s39 = sshll.u32 [#allocation7], 4
      %s40 = int_to_ptr.vmem [resolvable:$true] %s39
      %42 = dma.hbm_to_vmem [thread:$0]  %s2, 128, %s40, [#allocation6]
    $region13: #{tpu_custom_call.1} parent=1 // pred_fallthru
      _
    // Predicated region
    $region14: #{tpu_custom_call.1} parent=1 // pred_check
      _
    $region15: #{tpu_custom_call.1} parent=1 // pred_check_branch
      %44 = sbr.rel (0) target = $region17
    $region16: #{tpu_custom_call.1} parent=1 // pred_region
      %45 = dma.done [#allocation3], 512
    $region17: #{tpu_custom_call.1} parent=1 // pred_fallthru
      _
    // Predicated region
    $region18: #{tpu_custom_call.1} parent=1 // pred_check
      _
    $region19: #{tpu_custom_call.1} parent=1 // pred_check_branch
      %47 = sbr.rel (0) target = $region21
    $region20: #{tpu_custom_call.1} parent=1 // pred_region
      %48 = dma.done [#allocation6], 128
    $region21: #{tpu_custom_call.1} parent=1 // pred_fallthru
      _
    // Predicated region
    $region22: #{tpu_custom_call.1} parent=1 // pred_check
      _
    $region23: #{tpu_custom_call.1} parent=1 // pred_check_branch
      %50 = sbr.rel (0) target = $region25
    $region24: #{tpu_custom_call.1} parent=1 // pred_region
      %51 = dma.done [#allocation6], 128
    $region25: #{tpu_custom_call.1} parent=1 // pred_fallthru
      _
    %v52 = vlaneseq
    %v53 = vand.u32 %v52, 127
    %v54 = vadd.s32 %v53, 128
    %v55 = vand.u32 %v53, 15
    %v56 = vand.u32 %v54, 15
    %vm57 = vcmp.lt.s32.totalorder %v53, 16
    %vm58 = vcmp.lt.s32.totalorder %v54, 16
    %vm59 = vcmp.ge.s32.totalorder %v53, 240
    %vm60 = vcmp.ge.s32.totalorder %v54, 240
    %vm61 = vcmp.eq.s32.totalorder %v55, 0
    %vm62 = vcmp.eq.s32.totalorder %v56, 0
    %vm63 = vcmp.eq.s32.totalorder %v55, 15
    %vm64 = vcmp.eq.s32.totalorder %v56, 15
    %v65 = vadd.s32 %v53, 16
    %v66 = vadd.s32 %v54, 16
    %v67 = vsub.s32 %v53, 16
    %v68 = vsub.s32 %v54, 16
    %v69 = vsel %vm57, %v65, %v67
    %v70 = vsel %vm58, %v66, %v68
    %v71 = vsel %vm59, %v67, %v65
    %v72 = vsel %vm60, %v68, %v66
    %v73 = vadd.s32 %v53, 1
    %v74 = vadd.s32 %v54, 1
    %v75 = vsub.s32 %v53, 1
    %v76 = vsub.s32 %v54, 1
    %v77 = vsel %vm61, %v73, %v75
    %v78 = vsel %vm62, %v74, %v76
    %v79 = vsel %vm63, %v75, %v73
    %v80 = vsel %vm64, %v76, %v74
    %81 = vrot.lane.b32.xlu0 %v53, 16
    %v82 = vpop.permute.xlu0 %81
    %83 = vrot.lane.b32.xlu0 %v54, 16
    %v84 = vpop.permute.xlu0 %83
    %v85 = vsel %vm57, %v82, %v84
    %v86 = vsel %vm57, %v84, %v82
    %87 = vrot.lane.b32.xlu0 %v53, 1
    %v88 = vpop.permute.xlu0 %87
    %89 = vrot.lane.b32.xlu0 %v54, 1
    %v90 = vpop.permute.xlu0 %89
    %vm91 = vcmp.lt.s32.totalorder %v53, 1
    %v92 = vsel %vm91, %v88, %v90
    %v93 = vsel %vm91, %v90, %v88
    %vm94 = vcmp.eq.s32.totalorder %v86, %v69
    %vm95 = vcmp.eq.s32.totalorder %v85, %v70
    %vm96 = vcmp.eq.s32.totalorder %v86, %v71
    %vm97 = vcmp.eq.s32.totalorder %v85, %v72
    %vm98 = vcmp.eq.s32.totalorder %v93, %v77
    %vm99 = vcmp.eq.s32.totalorder %v92, %v78
    %vm100 = vcmp.eq.s32.totalorder %v93, %v79
    %vm101 = vcmp.eq.s32.totalorder %v92, %v80
    %v102 = vld [vmem:[#allocation2] sm:$0xff]
    %v103 = vld [vmem:[#allocation2 + $0x8] sm:$0xff]
    %104 = vrot.lane.b32.xlu0 %v102, 16
    %v105 = vpop.permute.xlu0 %104
    %106 = vrot.lane.b32.xlu0 %v103, 16
    %v107 = vpop.permute.xlu0 %106
    %v108 = vsel %vm57, %v105, %v107
    %v109 = vsel %vm57, %v107, %v105
    %110 = vrot.lane.b32.xlu0 %v102, 112
    %v111 = vpop.permute.xlu0 %110
    %112 = vrot.lane.b32.xlu0 %v103, 112
    %v113 = vpop.permute.xlu0 %112
    %vm114 = vcmp.lt.s32.totalorder %v53, 112
    %v115 = vsel %vm114, %v111, %v113
    %v116 = vsel %vm114, %v113, %v111
    %v117 = vsel %vm94, %v109, %v115
    %v118 = vsel %vm95, %v108, %v116
    %v119 = vsel %vm96, %v109, %v115
    %v120 = vsel %vm97, %v108, %v116
    %121 = vrot.lane.b32.xlu0 %v117, 1
    %v122 = vpop.permute.xlu0 %121
    %123 = vrot.lane.b32.xlu0 %v118, 1
    %v124 = vpop.permute.xlu0 %123
    %v125 = vsel %vm91, %v122, %v124
    %v126 = vsel %vm91, %v124, %v122
    %127 = vrot.lane.b32.xlu0 %v117, 127
    %v128 = vpop.permute.xlu0 %127
    %129 = vrot.lane.b32.xlu0 %v118, 127
    %v130 = vpop.permute.xlu0 %129
    %vm131 = vcmp.lt.s32.totalorder %v53, 127
    %v132 = vsel %vm131, %v128, %v130
    %v133 = vsel %vm131, %v130, %v128
    %v134 = vsel %vm98, %v126, %v132
    %v135 = vsel %vm99, %v125, %v133
    %v136 = vsel %vm100, %v126, %v132
    %v137 = vsel %vm101, %v125, %v133
    %v138 = vld [vmem:[#allocation5] sm:$0xff]
    %139 = vrot.lane.b32.xlu0 %v102, 1
    %v140 = vpop.permute.xlu0 %139
    %141 = vrot.lane.b32.xlu0 %v103, 1
    %v142 = vpop.permute.xlu0 %141
    %v143 = vsel %vm91, %v140, %v142
    %v144 = vsel %vm91, %v142, %v140
    %145 = vrot.lane.b32.xlu0 %v102, 127
    %v146 = vpop.permute.xlu0 %145
    %147 = vrot.lane.b32.xlu0 %v103, 127
    %v148 = vpop.permute.xlu0 %147
    %v149 = vsel %vm131, %v146, %v148
    %v150 = vsel %vm131, %v148, %v146
    %v151 = vsel %vm98, %v144, %v149
    %v152 = vsel %vm99, %v143, %v150
    %v153 = vsel %vm100, %v144, %v149
    %v154 = vsel %vm101, %v143, %v150
    %156 = vrot.lane.b32.xlu0 %v138, 104
    %v157 = vpop.permute.xlu0 %156
    %vm158 = vcmask 195584
    %v159 = vsel %vm158, %v157, 0
    %161 = vmatprep.subr.mxu0 %v152
    %162 = vmatpush1.msra.mxu0 %v151
    %163 = vmatprep.subr.mxu0 %v103
    %164 = vmatpush1.msra.mxu0 %v102
    %165 = vmatprep.subr.mxu0 %v154
    %166 = vmatpush1.msra.mxu0 %v153
    %167 = vmatprep.subr.mxu0 0.0
    %168 = vmatpush1.msra.mxu0 0.0
    %169 = vmatprep.subr.mxu0 0.0
    %170 = vmatpush1.msra.mxu0 0.0
    %171 = vmatprep.subr.mxu0 0.0
    %172 = vmatpush1.msra.mxu0 0.0
    %173 = vmatprep.subr.mxu0 0.0
    %174 = vmatpush1.msra.mxu0 0.0
    %175 = vmatprep.subr.mxu0 0.0
    %176 = vmatpush1.msra.mxu0 0.0
    %177 = vmatprep.subr.mxu0 0.0
    %178 = vmatpush1.msra.mxu0 0.0
    %179 = vmatprep.subr.mxu0 0.0
    %180 = vmatpush1.msra.mxu0 0.0
    %181 = vmatprep.subr.mxu0 0.0
    %182 = vmatpush1.msra.mxu0 0.0
    %183 = vmatprep.subr.mxu0 0.0
    %184 = vmatpush1.msra.mxu0 0.0
    %185 = vmatprep.subr.mxu0 0.0
    %186 = vmatpush1.msra.mxu0 0.0
    %187 = vmatprep.subr.mxu0 0.0
    %188 = vmatpush1.msra.mxu0 0.0
    %189 = vmatprep.subr.mxu0 0.0
    %190 = vmatpush1.msra.mxu0 0.0
    %191 = vmatprep.subr.mxu0 0.0
    %192 = vmatpush1.msra.mxu0 0.0
    %193 = vmatprep.subr.mxu0 0.0
    %194 = vmatpush1.msra.mxu0 0.0
    %195 = vmatprep.subr.mxu0 0.0
    %196 = vmatpush1.msra.mxu0 0.0
    %197 = vmatprep.subr.mxu0 0.0
    %198 = vmatpush1.msra.mxu0 0.0
    %199 = vmatprep.subr.mxu0 0.0
    %200 = vmatpush1.msra.mxu0 0.0
    %201 = vmatprep.subr.mxu0 0.0
    %202 = vmatpush1.msra.mxu0 0.0
    %203 = vmatprep.subr.mxu0 0.0
    %204 = vmatpush1.msra.mxu0 0.0
    %205 = vmatprep.subr.mxu0 0.0
    %206 = vmatpush1.msra.mxu0 0.0
    %207 = vmatprep.subr.mxu0 0.0
    %208 = vmatpush1.msra.mxu0 0.0
    %209 = vmatprep.subr.mxu0 0.0
    %210 = vmatpush1.msra.mxu0 0.0
    %211 = vmatprep.subr.mxu0 0.0
    %212 = vmatpush1.msra.mxu0 0.0
    %213 = vmatprep.subr.mxu0 0.0
    %214 = vmatpush1.msra.mxu0 0.0
    %215 = vmatprep.subr.mxu0 0.0
    %216 = vmatpush1.msra.mxu0 0.0
    %217 = vmatprep.subr.mxu0 0.0
    %218 = vmatpush1.msra.mxu0 0.0
    %219 = vmatprep.subr.mxu0 0.0
    %220 = vmatpush1.msra.mxu0 0.0
    %221 = vmatprep.subr.mxu0 0.0
    %222 = vmatpush1.msra.mxu0 0.0
    %223 = vmatprep.subr.mxu0 0.0
    %224 = vmatpush1.msra.mxu0 0.0
    %225 = vmatprep.mubr.f32.mxu0 0.0
    %226 = vmatmul.mubr.f32.gmra.mrb[0].mxu0 %v159
    %v227 = vpop.f32.mrb[0].mxu0
    %v228 = vadd.f32 0.0, %v227
    %v229 = vpop.f32.mrb[0].mxu0
    %v230 = vadd.f32 0.0, %v229
    %231 = vdwg.mxu0
    %v232 = vsel %vm158, %v138, 0
    %234 = vmatprep.subr.mxu0 %v135
    %235 = vmatpush1.msra.mxu0 %v134
    %236 = vmatprep.subr.mxu0 %v118
    %237 = vmatpush1.msra.mxu0 %v117
    %238 = vmatprep.subr.mxu0 %v137
    %239 = vmatpush1.msra.mxu0 %v136
    %240 = vmatprep.subr.mxu0 0.0
    %241 = vmatpush1.msra.mxu0 0.0
    %242 = vmatprep.subr.mxu0 0.0
    %243 = vmatpush1.msra.mxu0 0.0
    %244 = vmatprep.subr.mxu0 0.0
    %245 = vmatpush1.msra.mxu0 0.0
    %246 = vmatprep.subr.mxu0 0.0
    %247 = vmatpush1.msra.mxu0 0.0
    %248 = vmatprep.subr.mxu0 0.0
    %249 = vmatpush1.msra.mxu0 0.0
    %250 = vmatprep.subr.mxu0 0.0
    %251 = vmatpush1.msra.mxu0 0.0
    %252 = vmatprep.subr.mxu0 0.0
    %253 = vmatpush1.msra.mxu0 0.0
    %254 = vmatprep.subr.mxu0 0.0
    %255 = vmatpush1.msra.mxu0 0.0
    %256 = vmatprep.subr.mxu0 0.0
    %257 = vmatpush1.msra.mxu0 0.0
    %258 = vmatprep.subr.mxu0 0.0
    %259 = vmatpush1.msra.mxu0 0.0
    %260 = vmatprep.subr.mxu0 0.0
    %261 = vmatpush1.msra.mxu0 0.0
    %262 = vmatprep.subr.mxu0 0.0
    %263 = vmatpush1.msra.mxu0 0.0
    %264 = vmatprep.subr.mxu0 0.0
    %265 = vmatpush1.msra.mxu0 0.0
    %266 = vmatprep.subr.mxu0 0.0
    %267 = vmatpush1.msra.mxu0 0.0
    %268 = vmatprep.subr.mxu0 0.0
    %269 = vmatpush1.msra.mxu0 0.0
    %270 = vmatprep.subr.mxu0 0.0
    %271 = vmatpush1.msra.mxu0 0.0
    %272 = vmatprep.subr.mxu0 0.0
    %273 = vmatpush1.msra.mxu0 0.0
    %274 = vmatprep.subr.mxu0 0.0
    %275 = vmatpush1.msra.mxu0 0.0
    %276 = vmatprep.subr.mxu0 0.0
    %277 = vmatpush1.msra.mxu0 0.0
    %278 = vmatprep.subr.mxu0 0.0
    %279 = vmatpush1.msra.mxu0 0.0
    %280 = vmatprep.subr.mxu0 0.0
    %281 = vmatpush1.msra.mxu0 0.0
    %282 = vmatprep.subr.mxu0 0.0
    %283 = vmatpush1.msra.mxu0 0.0
    %284 = vmatprep.subr.mxu0 0.0
    %285 = vmatpush1.msra.mxu0 0.0
    %286 = vmatprep.subr.mxu0 0.0
    %287 = vmatpush1.msra.mxu0 0.0
    %288 = vmatprep.subr.mxu0 0.0
    %289 = vmatpush1.msra.mxu0 0.0
    %290 = vmatprep.subr.mxu0 0.0
    %291 = vmatpush1.msra.mxu0 0.0
    %292 = vmatprep.subr.mxu0 0.0
    %293 = vmatpush1.msra.mxu0 0.0
    %294 = vmatprep.subr.mxu0 0.0
    %295 = vmatpush1.msra.mxu0 0.0
    %296 = vmatprep.subr.mxu0 0.0
    %297 = vmatpush1.msra.mxu0 0.0
    %298 = vmatprep.mubr.f32.mxu0 0.0
    %299 = vmatmul.mubr.f32.gmra.mrb[0].mxu0 %v232
    %v300 = vpop.f32.mrb[0].mxu0
    %v301 = vadd.f32 %v228, %v300
    %v302 = vpop.f32.mrb[0].mxu0
    %v303 = vadd.f32 %v230, %v302
    %304 = vdwg.mxu0
    %305 = vrot.lane.b32.xlu0 %v119, 1
    %v306 = vpop.permute.xlu0 %305
    %307 = vrot.lane.b32.xlu0 %v120, 1
    %v308 = vpop.permute.xlu0 %307
    %v309 = vsel %vm91, %v306, %v308
    %v310 = vsel %vm91, %v308, %v306
    %311 = vrot.lane.b32.xlu0 %v119, 127
    %v312 = vpop.permute.xlu0 %311
    %313 = vrot.lane.b32.xlu0 %v120, 127
    %v314 = vpop.permute.xlu0 %313
    %v315 = vsel %vm131, %v312, %v314
    %v316 = vsel %vm131, %v314, %v312
    %v317 = vsel %vm98, %v310, %v315
    %v318 = vsel %vm99, %v309, %v316
    %v319 = vsel %vm100, %v310, %v315
    %v320 = vsel %vm101, %v309, %v316
    %321 = vrot.lane.b32.xlu0 %v138, 80
    %v322 = vpop.permute.xlu0 %321
    %v323 = vsel %vm158, %v322, 0
    %325 = vmatprep.subr.mxu0 %v318
    %326 = vmatpush1.msra.mxu0 %v317
    %327 = vmatprep.subr.mxu0 %v120
    %328 = vmatpush1.msra.mxu0 %v119
    %329 = vmatprep.subr.mxu0 %v320
    %330 = vmatpush1.msra.mxu0 %v319
    %331 = vmatprep.subr.mxu0 0.0
    %332 = vmatpush1.msra.mxu0 0.0
    %333 = vmatprep.subr.mxu0 0.0
    %334 = vmatpush1.msra.mxu0 0.0
    %335 = vmatprep.subr.mxu0 0.0
    %336 = vmatpush1.msra.mxu0 0.0
    %337 = vmatprep.subr.mxu0 0.0
    %338 = vmatpush1.msra.mxu0 0.0
    %339 = vmatprep.subr.mxu0 0.0
    %340 = vmatpush1.msra.mxu0 0.0
    %341 = vmatprep.subr.mxu0 0.0
    %342 = vmatpush1.msra.mxu0 0.0
    %343 = vmatprep.subr.mxu0 0.0
    %344 = vmatpush1.msra.mxu0 0.0
    %345 = vmatprep.subr.mxu0 0.0
    %346 = vmatpush1.msra.mxu0 0.0
    %347 = vmatprep.subr.mxu0 0.0
    %348 = vmatpush1.msra.mxu0 0.0
    %349 = vmatprep.subr.mxu0 0.0
    %350 = vmatpush1.msra.mxu0 0.0
    %351 = vmatprep.subr.mxu0 0.0
    %352 = vmatpush1.msra.mxu0 0.0
    %353 = vmatprep.subr.mxu0 0.0
    %354 = vmatpush1.msra.mxu0 0.0
    %355 = vmatprep.subr.mxu0 0.0
    %356 = vmatpush1.msra.mxu0 0.0
    %357 = vmatprep.subr.mxu0 0.0
    %358 = vmatpush1.msra.mxu0 0.0
    %359 = vmatprep.subr.mxu0 0.0
    %360 = vmatpush1.msra.mxu0 0.0
    %361 = vmatprep.subr.mxu0 0.0
    %362 = vmatpush1.msra.mxu0 0.0
    %363 = vmatprep.subr.mxu0 0.0
    %364 = vmatpush1.msra.mxu0 0.0
    %365 = vmatprep.subr.mxu0 0.0
    %366 = vmatpush1.msra.mxu0 0.0
    %367 = vmatprep.subr.mxu0 0.0
    %368 = vmatpush1.msra.mxu0 0.0
    %369 = vmatprep.subr.mxu0 0.0
    %370 = vmatpush1.msra.mxu0 0.0
    %371 = vmatprep.subr.mxu0 0.0
    %372 = vmatpush1.msra.mxu0 0.0
    %373 = vmatprep.subr.mxu0 0.0
    %374 = vmatpush1.msra.mxu0 0.0
    %375 = vmatprep.subr.mxu0 0.0
    %376 = vmatpush1.msra.mxu0 0.0
    %377 = vmatprep.subr.mxu0 0.0
    %378 = vmatpush1.msra.mxu0 0.0
    %379 = vmatprep.subr.mxu0 0.0
    %380 = vmatpush1.msra.mxu0 0.0
    %381 = vmatprep.subr.mxu0 0.0
    %382 = vmatpush1.msra.mxu0 0.0
    %383 = vmatprep.subr.mxu0 0.0
    %384 = vmatpush1.msra.mxu0 0.0
    %385 = vmatprep.subr.mxu0 0.0
    %386 = vmatpush1.msra.mxu0 0.0
    %387 = vmatprep.subr.mxu0 0.0
    %388 = vmatpush1.msra.mxu0 0.0
    %389 = vmatprep.mubr.f32.mxu0 0.0
    %390 = vmatmul.mubr.f32.gmra.mrb[0].mxu0 %v323
    %v391 = vpop.f32.mrb[0].mxu0
    %v392 = vadd.f32 0.0, %v391
    %v393 = vpop.f32.mrb[0].mxu0
    %v394 = vadd.f32 0.0, %v393
    %395 = vdwg.mxu0
    %v396 = vadd.f32 %v301, %v392
    %v397 = vadd.f32 %v303, %v394
    %v398 = vadd.f32 %v396, %v397
    %399 = vadd.xlane.f32.xlu0 %v398
    %v400 = vpop.xlane.xlu0 %399
    %v401 = vmul.f32 %v400, 0.00390625
    %v402 = vsub.f32 %v396, %v401
    %v403 = vsub.f32 %v397, %v401
    %v404 = vmul.f32 %v402, %v402
    %v405 = vmul.f32 %v403, %v403
    %v406 = vadd.f32 %v404, %v405
    %407 = vadd.xlane.f32.xlu0 %v406
    %v408 = vpop.xlane.xlu0 %407
    %v409 = vmul.f32 %v408, 0.00390625
    %v410 = vadd.f32 %v409, 1e-05
    %v411 = vrsqrt.pop %v410
    %v412 = vmul.f32 %v402, %v411
    %v413 = vmul.f32 %v403, %v411
    %v414 = vmax.f32 %v412, 0.0
    %v415 = vmax.f32 %v413, 0.0
    %416 = vrot.lane.b32.xlu0 %v414, 16
    %v417 = vpop.permute.xlu0 %416
    %418 = vrot.lane.b32.xlu0 %v415, 16
    %v419 = vpop.permute.xlu0 %418
    %v420 = vsel %vm57, %v417, %v419
    %v421 = vsel %vm57, %v419, %v417
    %422 = vrot.lane.b32.xlu0 %v414, 112
    %v423 = vpop.permute.xlu0 %422
    %424 = vrot.lane.b32.xlu0 %v415, 112
    %v425 = vpop.permute.xlu0 %424
    %v426 = vsel %vm114, %v423, %v425
    %v427 = vsel %vm114, %v425, %v423
    %v428 = vsel %vm94, %v421, %v426
    %v429 = vsel %vm95, %v420, %v427
    %v430 = vsel %vm96, %v421, %v426
    %v431 = vsel %vm97, %v420, %v427
    %432 = vrot.lane.b32.xlu0 %v428, 1
    %v433 = vpop.permute.xlu0 %432
    %434 = vrot.lane.b32.xlu0 %v429, 1
    %v435 = vpop.permute.xlu0 %434
    %v436 = vsel %vm91, %v433, %v435
    %v437 = vsel %vm91, %v435, %v433
    %438 = vrot.lane.b32.xlu0 %v428, 127
    %v439 = vpop.permute.xlu0 %438
    %440 = vrot.lane.b32.xlu0 %v429, 127
    %v441 = vpop.permute.xlu0 %440
    %v442 = vsel %vm131, %v439, %v441
    %v443 = vsel %vm131, %v441, %v439
    %v444 = vsel %vm98, %v437, %v442
    %v445 = vsel %vm99, %v436, %v443
    %v446 = vsel %vm100, %v437, %v442
    %v447 = vsel %vm101, %v436, %v443
    %v448 = vld [vmem:[#allocation7] sm:$0xff]
    %449 = vrot.lane.b32.xlu0 %v414, 1
    %v450 = vpop.permute.xlu0 %449
    %451 = vrot.lane.b32.xlu0 %v415, 1
    %v452 = vpop.permute.xlu0 %451
    %v453 = vsel %vm91, %v450, %v452
    %v454 = vsel %vm91, %v452, %v450
    %455 = vrot.lane.b32.xlu0 %v414, 127
    %v456 = vpop.permute.xlu0 %455
    %457 = vrot.lane.b32.xlu0 %v415, 127
    %v458 = vpop.permute.xlu0 %457
    %v459 = vsel %vm131, %v456, %v458
    %v460 = vsel %vm131, %v458, %v456
    %v461 = vsel %vm98, %v454, %v459
    %v462 = vsel %vm99, %v453, %v460
    %v463 = vsel %vm100, %v454, %v459
    %v464 = vsel %vm101, %v453, %v460
    %466 = vrot.lane.b32.xlu0 %v448, 104
    %v467 = vpop.permute.xlu0 %466
    %v468 = vsel %vm158, %v467, 0
    %470 = vmatprep.subr.mxu0 %v462
    %471 = vmatpush1.msra.mxu0 %v461
    %472 = vmatprep.subr.mxu0 %v415
    %473 = vmatpush1.msra.mxu0 %v414
    %474 = vmatprep.subr.mxu0 %v464
    %475 = vmatpush1.msra.mxu0 %v463
    %476 = vmatprep.subr.mxu0 0.0
    %477 = vmatpush1.msra.mxu0 0.0
    %478 = vmatprep.subr.mxu0 0.0
    %479 = vmatpush1.msra.mxu0 0.0
    %480 = vmatprep.subr.mxu0 0.0
    %481 = vmatpush1.msra.mxu0 0.0
    %482 = vmatprep.subr.mxu0 0.0
    %483 = vmatpush1.msra.mxu0 0.0
    %484 = vmatprep.subr.mxu0 0.0
    %485 = vmatpush1.msra.mxu0 0.0
    %486 = vmatprep.subr.mxu0 0.0
    %487 = vmatpush1.msra.mxu0 0.0
    %488 = vmatprep.subr.mxu0 0.0
    %489 = vmatpush1.msra.mxu0 0.0
    %490 = vmatprep.subr.mxu0 0.0
    %491 = vmatpush1.msra.mxu0 0.0
    %492 = vmatprep.subr.mxu0 0.0
    %493 = vmatpush1.msra.mxu0 0.0
    %494 = vmatprep.subr.mxu0 0.0
    %495 = vmatpush1.msra.mxu0 0.0
    %496 = vmatprep.subr.mxu0 0.0
    %497 = vmatpush1.msra.mxu0 0.0
    %498 = vmatprep.subr.mxu0 0.0
    %499 = vmatpush1.msra.mxu0 0.0
    %500 = vmatprep.subr.mxu0 0.0
    %501 = vmatpush1.msra.mxu0 0.0
    %502 = vmatprep.subr.mxu0 0.0
    %503 = vmatpush1.msra.mxu0 0.0
    %504 = vmatprep.subr.mxu0 0.0
    %505 = vmatpush1.msra.mxu0 0.0
    %506 = vmatprep.subr.mxu0 0.0
    %507 = vmatpush1.msra.mxu0 0.0
    %508 = vmatprep.subr.mxu0 0.0
    %509 = vmatpush1.msra.mxu0 0.0
    %510 = vmatprep.subr.mxu0 0.0
    %511 = vmatpush1.msra.mxu0 0.0
    %512 = vmatprep.subr.mxu0 0.0
    %513 = vmatpush1.msra.mxu0 0.0
    %514 = vmatprep.subr.mxu0 0.0
    %515 = vmatpush1.msra.mxu0 0.0
    %516 = vmatprep.subr.mxu0 0.0
    %517 = vmatpush1.msra.mxu0 0.0
    %518 = vmatprep.subr.mxu0 0.0
    %519 = vmatpush1.msra.mxu0 0.0
    %520 = vmatprep.subr.mxu0 0.0
    %521 = vmatpush1.msra.mxu0 0.0
    %522 = vmatprep.subr.mxu0 0.0
    %523 = vmatpush1.msra.mxu0 0.0
    %524 = vmatprep.subr.mxu0 0.0
    %525 = vmatpush1.msra.mxu0 0.0
    %526 = vmatprep.subr.mxu0 0.0
    %527 = vmatpush1.msra.mxu0 0.0
    %528 = vmatprep.subr.mxu0 0.0
    %529 = vmatpush1.msra.mxu0 0.0
    %530 = vmatprep.subr.mxu0 0.0
    %531 = vmatpush1.msra.mxu0 0.0
    %532 = vmatprep.subr.mxu0 0.0
    %533 = vmatpush1.msra.mxu0 0.0
    %534 = vmatprep.mubr.f32.mxu0 0.0
    %535 = vmatmul.mubr.f32.gmra.mrb[0].mxu0 %v468
    %v536 = vpop.f32.mrb[0].mxu0
    %v537 = vadd.f32 0.0, %v536
    %v538 = vpop.f32.mrb[0].mxu0
    %v539 = vadd.f32 0.0, %v538
    %540 = vdwg.mxu0
    %v541 = vsel %vm158, %v448, 0
    %543 = vmatprep.subr.mxu0 %v445
    %544 = vmatpush1.msra.mxu0 %v444
    %545 = vmatprep.subr.mxu0 %v429
    %546 = vmatpush1.msra.mxu0 %v428
    %547 = vmatprep.subr.mxu0 %v447
    %548 = vmatpush1.msra.mxu0 %v446
    %549 = vmatprep.subr.mxu0 0.0
    %550 = vmatpush1.msra.mxu0 0.0
    %551 = vmatprep.subr.mxu0 0.0
    %552 = vmatpush1.msra.mxu0 0.0
    %553 = vmatprep.subr.mxu0 0.0
    %554 = vmatpush1.msra.mxu0 0.0
    %555 = vmatprep.subr.mxu0 0.0
    %556 = vmatpush1.msra.mxu0 0.0
    %557 = vmatprep.subr.mxu0 0.0
    %558 = vmatpush1.msra.mxu0 0.0
    %559 = vmatprep.subr.mxu0 0.0
    %560 = vmatpush1.msra.mxu0 0.0
    %561 = vmatprep.subr.mxu0 0.0
    %562 = vmatpush1.msra.mxu0 0.0
    %563 = vmatprep.subr.mxu0 0.0
    %564 = vmatpush1.msra.mxu0 0.0
    %565 = vmatprep.subr.mxu0 0.0
    %566 = vmatpush1.msra.mxu0 0.0
    %567 = vmatprep.subr.mxu0 0.0
    %568 = vmatpush1.msra.mxu0 0.0
    %569 = vmatprep.subr.mxu0 0.0
    %570 = vmatpush1.msra.mxu0 0.0
    %571 = vmatprep.subr.mxu0 0.0
    %572 = vmatpush1.msra.mxu0 0.0
    %573 = vmatprep.subr.mxu0 0.0
    %574 = vmatpush1.msra.mxu0 0.0
    %575 = vmatprep.subr.mxu0 0.0
    %576 = vmatpush1.msra.mxu0 0.0
    %577 = vmatprep.subr.mxu0 0.0
    %578 = vmatpush1.msra.mxu0 0.0
    %579 = vmatprep.subr.mxu0 0.0
    %580 = vmatpush1.msra.mxu0 0.0
    %581 = vmatprep.subr.mxu0 0.0
    %582 = vmatpush1.msra.mxu0 0.0
    %583 = vmatprep.subr.mxu0 0.0
    %584 = vmatpush1.msra.mxu0 0.0
    %585 = vmatprep.subr.mxu0 0.0
    %586 = vmatpush1.msra.mxu0 0.0
    %587 = vmatprep.subr.mxu0 0.0
    %588 = vmatpush1.msra.mxu0 0.0
    %589 = vmatprep.subr.mxu0 0.0
    %590 = vmatpush1.msra.mxu0 0.0
    %591 = vmatprep.subr.mxu0 0.0
    %592 = vmatpush1.msra.mxu0 0.0
    %593 = vmatprep.subr.mxu0 0.0
    %594 = vmatpush1.msra.mxu0 0.0
    %595 = vmatprep.subr.mxu0 0.0
    %596 = vmatpush1.msra.mxu0 0.0
    %597 = vmatprep.subr.mxu0 0.0
    %598 = vmatpush1.msra.mxu0 0.0
    %599 = vmatprep.subr.mxu0 0.0
    %600 = vmatpush1.msra.mxu0 0.0
    %601 = vmatprep.subr.mxu0 0.0
    %602 = vmatpush1.msra.mxu0 0.0
    %603 = vmatprep.subr.mxu0 0.0
    %604 = vmatpush1.msra.mxu0 0.0
    %605 = vmatprep.subr.mxu0 0.0
    %606 = vmatpush1.msra.mxu0 0.0
    %607 = vmatprep.mubr.f32.mxu0 0.0
    %608 = vmatmul.mubr.f32.gmra.mrb[0].mxu0 %v541
    %v609 = vpop.f32.mrb[0].mxu0
    %v610 = vadd.f32 %v537, %v609
    %v611 = vpop.f32.mrb[0].mxu0
    %v612 = vadd.f32 %v539, %v611
    %613 = vdwg.mxu0
    %614 = vrot.lane.b32.xlu0 %v430, 1
    %v615 = vpop.permute.xlu0 %614
    %616 = vrot.lane.b32.xlu0 %v431, 1
    %v617 = vpop.permute.xlu0 %616
    %v618 = vsel %vm91, %v615, %v617
    %v619 = vsel %vm91, %v617, %v615
    %620 = vrot.lane.b32.xlu0 %v430, 127
    %v621 = vpop.permute.xlu0 %620
    %622 = vrot.lane.b32.xlu0 %v431, 127
    %v623 = vpop.permute.xlu0 %622
    %v624 = vsel %vm131, %v621, %v623
    %v625 = vsel %vm131, %v623, %v621
    %v626 = vsel %vm98, %v619, %v624
    %v627 = vsel %vm99, %v618, %v625
    %v628 = vsel %vm100, %v619, %v624
    %v629 = vsel %vm101, %v618, %v625
    %630 = vrot.lane.b32.xlu0 %v448, 80
    %v631 = vpop.permute.xlu0 %630
    %v632 = vsel %vm158, %v631, 0
    %634 = vmatprep.subr.mxu0 %v627
    %635 = vmatpush1.msra.mxu0 %v626
    %636 = vmatprep.subr.mxu0 %v431
    %637 = vmatpush1.msra.mxu0 %v430
    %638 = vmatprep.subr.mxu0 %v629
    %639 = vmatpush1.msra.mxu0 %v628
    %640 = vmatprep.subr.mxu0 0.0
    %641 = vmatpush1.msra.mxu0 0.0
    %642 = vmatprep.subr.mxu0 0.0
    %643 = vmatpush1.msra.mxu0 0.0
    %644 = vmatprep.subr.mxu0 0.0
    %645 = vmatpush1.msra.mxu0 0.0
    %646 = vmatprep.subr.mxu0 0.0
    %647 = vmatpush1.msra.mxu0 0.0
    %648 = vmatprep.subr.mxu0 0.0
    %649 = vmatpush1.msra.mxu0 0.0
    %650 = vmatprep.subr.mxu0 0.0
    %651 = vmatpush1.msra.mxu0 0.0
    %652 = vmatprep.subr.mxu0 0.0
    %653 = vmatpush1.msra.mxu0 0.0
    %654 = vmatprep.subr.mxu0 0.0
    %655 = vmatpush1.msra.mxu0 0.0
    %656 = vmatprep.subr.mxu0 0.0
    %657 = vmatpush1.msra.mxu0 0.0
    %658 = vmatprep.subr.mxu0 0.0
    %659 = vmatpush1.msra.mxu0 0.0
    %660 = vmatprep.subr.mxu0 0.0
    %661 = vmatpush1.msra.mxu0 0.0
    %662 = vmatprep.subr.mxu0 0.0
    %663 = vmatpush1.msra.mxu0 0.0
    %664 = vmatprep.subr.mxu0 0.0
    %665 = vmatpush1.msra.mxu0 0.0
    %666 = vmatprep.subr.mxu0 0.0
    %667 = vmatpush1.msra.mxu0 0.0
    %668 = vmatprep.subr.mxu0 0.0
    %669 = vmatpush1.msra.mxu0 0.0
    %670 = vmatprep.subr.mxu0 0.0
    %671 = vmatpush1.msra.mxu0 0.0
    %672 = vmatprep.subr.mxu0 0.0
    %673 = vmatpush1.msra.mxu0 0.0
    %674 = vmatprep.subr.mxu0 0.0
    %675 = vmatpush1.msra.mxu0 0.0
    %676 = vmatprep.subr.mxu0 0.0
    %677 = vmatpush1.msra.mxu0 0.0
    %678 = vmatprep.subr.mxu0 0.0
    %679 = vmatpush1.msra.mxu0 0.0
    %680 = vmatprep.subr.mxu0 0.0
    %681 = vmatpush1.msra.mxu0 0.0
    %682 = vmatprep.subr.mxu0 0.0
    %683 = vmatpush1.msra.mxu0 0.0
    %684 = vmatprep.subr.mxu0 0.0
    %685 = vmatpush1.msra.mxu0 0.0
    %686 = vmatprep.subr.mxu0 0.0
    %687 = vmatpush1.msra.mxu0 0.0
    %688 = vmatprep.subr.mxu0 0.0
    %689 = vmatpush1.msra.mxu0 0.0
    %690 = vmatprep.subr.mxu0 0.0
    %691 = vmatpush1.msra.mxu0 0.0
    %692 = vmatprep.subr.mxu0 0.0
    %693 = vmatpush1.msra.mxu0 0.0
    %694 = vmatprep.subr.mxu0 0.0
    %695 = vmatpush1.msra.mxu0 0.0
    %696 = vmatprep.subr.mxu0 0.0
    %697 = vmatpush1.msra.mxu0 0.0
    %698 = vmatprep.mubr.f32.mxu0 0.0
    %699 = vmatmul.mubr.f32.gmra.mrb[0].mxu0 %v632
    %v700 = vpop.f32.mrb[0].mxu0
    %v701 = vadd.f32 0.0, %v700
    %v702 = vpop.f32.mrb[0].mxu0
    %v703 = vadd.f32 0.0, %v702
    %704 = vdwg.mxu0
    %v705 = vadd.f32 %v610, %v701
    %v706 = vadd.f32 %v612, %v703
    %v707 = vadd.f32 %v705, %v706
    %708 = vadd.xlane.f32.xlu0 %v707
    %v709 = vpop.xlane.xlu0 %708
    %v710 = vmul.f32 %v709, 0.00390625
    %v711 = vsub.f32 %v705, %v710
    %v712 = vsub.f32 %v706, %v710
    %v713 = vmul.f32 %v711, %v711
    %v714 = vmul.f32 %v712, %v712
    %v715 = vadd.f32 %v713, %v714
    %716 = vadd.xlane.f32.xlu0 %v715
    %v717 = vpop.xlane.xlu0 %716
    %v718 = vmul.f32 %v717, 0.00390625
    %v719 = vadd.f32 %v718, 1e-05
    %v720 = vrsqrt.pop %v719
    %v721 = vmul.f32 %v711, %v720
    %v722 = vmul.f32 %v712, %v720
    %v723 = vadd.f32 %v102, %v721
    %v724 = vadd.f32 %v103, %v722
    %725 = vst [vmem:[#allocation8] sm:$0xff] %v723
    %726 = vst [vmem:[#allocation8 + $0x8] sm:$0xff] %v724
    %s727 = scalar_lea.vmem [#allocation2], 16
    %v728 = vld [vmem:[%s727] sm:$0xff]
    %v729 = vld [vmem:[%s727 + $0x8] sm:$0xff]
    %730 = vrot.lane.b32.xlu0 %v728, 16
    %v731 = vpop.permute.xlu0 %730
    %732 = vrot.lane.b32.xlu0 %v729, 16
    %v733 = vpop.permute.xlu0 %732
    %v734 = vsel %vm57, %v731, %v733
    %v735 = vsel %vm57, %v733, %v731
    %736 = vrot.lane.b32.xlu0 %v728, 112
    %v737 = vpop.permute.xlu0 %736
    %738 = vrot.lane.b32.xlu0 %v729, 112
    %v739 = vpop.permute.xlu0 %738
    %v740 = vsel %vm114, %v737, %v739
    %v741 = vsel %vm114, %v739, %v737
    %v742 = vsel %vm94, %v735, %v740
    %v743 = vsel %vm95, %v734, %v741
    %v744 = vsel %vm96, %v735, %v740
    %v745 = vsel %vm97, %v734, %v741
    %746 = vrot.lane.b32.xlu0 %v742, 1
    %v747 = vpop.permute.xlu0 %746
    %748 = vrot.lane.b32.xlu0 %v743, 1
    %v749 = vpop.permute.xlu0 %748
    %v750 = vsel %vm91, %v747, %v749
    %v751 = vsel %vm91, %v749, %v747
    %752 = vrot.lane.b32.xlu0 %v742, 127
    %v753 = vpop.permute.xlu0 %752
    %754 = vrot.lane.b32.xlu0 %v743, 127
    %v755 = vpop.permute.xlu0 %754
    %v756 = vsel %vm131, %v753, %v755
    %v757 = vsel %vm131, %v755, %v753
    %v758 = vsel %vm98, %v751, %v756
    %v759 = vsel %vm99, %v750, %v757
    %v760 = vsel %vm100, %v751, %v756
    %v761 = vsel %vm101, %v750, %v757
    %v762 = vld [vmem:[#allocation5] sm:$0xff]
    %763 = vrot.lane.b32.xlu0 %v728, 1
    %v764 = vpop.permute.xlu0 %763
    %765 = vrot.lane.b32.xlu0 %v729, 1
    %v766 = vpop.permute.xlu0 %765
    %v767 = vsel %vm91, %v764, %v766
    %v768 = vsel %vm91, %v766, %v764
    %769 = vrot.lane.b32.xlu0 %v728, 127
    %v770 = vpop.permute.xlu0 %769
    %771 = vrot.lane.b32.xlu0 %v729, 127
    %v772 = vpop.permute.xlu0 %771
    %v773 = vsel %vm131, %v770, %v772
    %v774 = vsel %vm131, %v772, %v770
    %v775 = vsel %vm98, %v768, %v773
    %v776 = vsel %vm99, %v767, %v774
    %v777 = vsel %vm100, %v768, %v773
    %v778 = vsel %vm101, %v767, %v774
    %780 = vrot.lane.b32.xlu0 %v762, 104
    %v781 = vpop.permute.xlu0 %780
    %v782 = vsel %vm158, %v781, 0
    %784 = vmatprep.subr.mxu0 %v776
    %785 = vmatpush1.msra.mxu0 %v775
    %786 = vmatprep.subr.mxu0 %v729
    %787 = vmatpush1.msra.mxu0 %v728
    %788 = vmatprep.subr.mxu0 %v778
    %789 = vmatpush1.msra.mxu0 %v777
    %790 = vmatprep.subr.mxu0 0.0
    %791 = vmatpush1.msra.mxu0 0.0
    %792 = vmatprep.subr.mxu0 0.0
    %793 = vmatpush1.msra.mxu0 0.0
    %794 = vmatprep.subr.mxu0 0.0
    %795 = vmatpush1.msra.mxu0 0.0
    %796 = vmatprep.subr.mxu0 0.0
    %797 = vmatpush1.msra.mxu0 0.0
    %798 = vmatprep.subr.mxu0 0.0
    %799 = vmatpush1.msra.mxu0 0.0
    %800 = vmatprep.subr.mxu0 0.0
    %801 = vmatpush1.msra.mxu0 0.0
    %802 = vmatprep.subr.mxu0 0.0
    %803 = vmatpush1.msra.mxu0 0.0
    %804 = vmatprep.subr.mxu0 0.0
    %805 = vmatpush1.msra.mxu0 0.0
    %806 = vmatprep.subr.mxu0 0.0
    %807 = vmatpush1.msra.mxu0 0.0
    %808 = vmatprep.subr.mxu0 0.0
    %809 = vmatpush1.msra.mxu0 0.0
    %810 = vmatprep.subr.mxu0 0.0
    %811 = vmatpush1.msra.mxu0 0.0
    %812 = vmatprep.subr.mxu0 0.0
    %813 = vmatpush1.msra.mxu0 0.0
    %814 = vmatprep.subr.mxu0 0.0
    %815 = vmatpush1.msra.mxu0 0.0
    %816 = vmatprep.subr.mxu0 0.0
    %817 = vmatpush1.msra.mxu0 0.0
    %818 = vmatprep.subr.mxu0 0.0
    %819 = vmatpush1.msra.mxu0 0.0
    %820 = vmatprep.subr.mxu0 0.0
    %821 = vmatpush1.msra.mxu0 0.0
    %822 = vmatprep.subr.mxu0 0.0
    %823 = vmatpush1.msra.mxu0 0.0
    %824 = vmatprep.subr.mxu0 0.0
    %825 = vmatpush1.msra.mxu0 0.0
    %826 = vmatprep.subr.mxu0 0.0
    %827 = vmatpush1.msra.mxu0 0.0
    %828 = vmatprep.subr.mxu0 0.0
    %829 = vmatpush1.msra.mxu0 0.0
    %830 = vmatprep.subr.mxu0 0.0
    %831 = vmatpush1.msra.mxu0 0.0
    %832 = vmatprep.subr.mxu0 0.0
    %833 = vmatpush1.msra.mxu0 0.0
    %834 = vmatprep.subr.mxu0 0.0
    %835 = vmatpush1.msra.mxu0 0.0
    %836 = vmatprep.subr.mxu0 0.0
    %837 = vmatpush1.msra.mxu0 0.0
    %838 = vmatprep.subr.mxu0 0.0
    %839 = vmatpush1.msra.mxu0 0.0
    %840 = vmatprep.subr.mxu0 0.0
    %841 = vmatpush1.msra.mxu0 0.0
    %842 = vmatprep.subr.mxu0 0.0
    %843 = vmatpush1.msra.mxu0 0.0
    %844 = vmatprep.subr.mxu0 0.0
    %845 = vmatpush1.msra.mxu0 0.0
    %846 = vmatprep.subr.mxu0 0.0
    %847 = vmatpush1.msra.mxu0 0.0
    %848 = vmatprep.mubr.f32.mxu0 0.0
    %849 = vmatmul.mubr.f32.gmra.mrb[0].mxu0 %v782
    %v850 = vpop.f32.mrb[0].mxu0
    %v851 = vadd.f32 0.0, %v850
    %v852 = vpop.f32.mrb[0].mxu0
    %v853 = vadd.f32 0.0, %v852
    %854 = vdwg.mxu0
    %v855 = vsel %vm158, %v762, 0
    %857 = vmatprep.subr.mxu0 %v759
    %858 = vmatpush1.msra.mxu0 %v758
    %859 = vmatprep.subr.mxu0 %v743
    %860 = vmatpush1.msra.mxu0 %v742
    %861 = vmatprep.subr.mxu0 %v761
    %862 = vmatpush1.msra.mxu0 %v760
    %863 = vmatprep.subr.mxu0 0.0
    %864 = vmatpush1.msra.mxu0 0.0
    %865 = vmatprep.subr.mxu0 0.0
    %866 = vmatpush1.msra.mxu0 0.0
    %867 = vmatprep.subr.mxu0 0.0
    %868 = vmatpush1.msra.mxu0 0.0
    %869 = vmatprep.subr.mxu0 0.0
    %870 = vmatpush1.msra.mxu0 0.0
    %871 = vmatprep.subr.mxu0 0.0
    %872 = vmatpush1.msra.mxu0 0.0
    %873 = vmatprep.subr.mxu0 0.0
    %874 = vmatpush1.msra.mxu0 0.0
    %875 = vmatprep.subr.mxu0 0.0
    %876 = vmatpush1.msra.mxu0 0.0
    %877 = vmatprep.subr.mxu0 0.0
    %878 = vmatpush1.msra.mxu0 0.0
    %879 = vmatprep.subr.mxu0 0.0
    %880 = vmatpush1.msra.mxu0 0.0
    %881 = vmatprep.subr.mxu0 0.0
    %882 = vmatpush1.msra.mxu0 0.0
    %883 = vmatprep.subr.mxu0 0.0
    %884 = vmatpush1.msra.mxu0 0.0
    %885 = vmatprep.subr.mxu0 0.0
    %886 = vmatpush1.msra.mxu0 0.0
    %887 = vmatprep.subr.mxu0 0.0
    %888 = vmatpush1.msra.mxu0 0.0
    %889 = vmatprep.subr.mxu0 0.0
    %890 = vmatpush1.msra.mxu0 0.0
    %891 = vmatprep.subr.mxu0 0.0
    %892 = vmatpush1.msra.mxu0 0.0
    %893 = vmatprep.subr.mxu0 0.0
    %894 = vmatpush1.msra.mxu0 0.0
    %895 = vmatprep.subr.mxu0 0.0
    %896 = vmatpush1.msra.mxu0 0.0
    %897 = vmatprep.subr.mxu0 0.0
    %898 = vmatpush1.msra.mxu0 0.0
    %899 = vmatprep.subr.mxu0 0.0
    %900 = vmatpush1.msra.mxu0 0.0
    %901 = vmatprep.subr.mxu0 0.0
    %902 = vmatpush1.msra.mxu0 0.0
    %903 = vmatprep.subr.mxu0 0.0
    %904 = vmatpush1.msra.mxu0 0.0
    %905 = vmatprep.subr.mxu0 0.0
    %906 = vmatpush1.msra.mxu0 0.0
    %907 = vmatprep.subr.mxu0 0.0
    %908 = vmatpush1.msra.mxu0 0.0
    %909 = vmatprep.subr.mxu0 0.0
    %910 = vmatpush1.msra.mxu0 0.0
    %911 = vmatprep.subr.mxu0 0.0
    %912 = vmatpush1.msra.mxu0 0.0
    %913 = vmatprep.subr.mxu0 0.0
    %914 = vmatpush1.msra.mxu0 0.0
    %915 = vmatprep.subr.mxu0 0.0
    %916 = vmatpush1.msra.mxu0 0.0
    %917 = vmatprep.subr.mxu0 0.0
    %918 = vmatpush1.msra.mxu0 0.0
    %919 = vmatprep.subr.mxu0 0.0
    %920 = vmatpush1.msra.mxu0 0.0
    %921 = vmatprep.mubr.f32.mxu0 0.0
    %922 = vmatmul.mubr.f32.gmra.mrb[0].mxu0 %v855
    %v923 = vpop.f32.mrb[0].mxu0
    %v924 = vadd.f32 %v851, %v923
    %v925 = vpop.f32.mrb[0].mxu0
    %v926 = vadd.f32 %v853, %v925
    %927 = vdwg.mxu0
    %928 = vrot.lane.b32.xlu0 %v744, 1
    %v929 = vpop.permute.xlu0 %928
    %930 = vrot.lane.b32.xlu0 %v745, 1
    %v931 = vpop.permute.xlu0 %930
    %v932 = vsel %vm91, %v929, %v931
    %v933 = vsel %vm91, %v931, %v929
    %934 = vrot.lane.b32.xlu0 %v744, 127
    %v935 = vpop.permute.xlu0 %934
    %936 = vrot.lane.b32.xlu0 %v745, 127
    %v937 = vpop.permute.xlu0 %936
    %v938 = vsel %vm131, %v935, %v937
    %v939 = vsel %vm131, %v937, %v935
    %v940 = vsel %vm98, %v933, %v938
    %v941 = vsel %vm99, %v932, %v939
    %v942 = vsel %vm100, %v933, %v938
    %v943 = vsel %vm101, %v932, %v939
    %944 = vrot.lane.b32.xlu0 %v762, 80
    %v945 = vpop.permute.xlu0 %944
    %v946 = vsel %vm158, %v945, 0
    %948 = vmatprep.subr.mxu0 %v941
    %949 = vmatpush1.msra.mxu0 %v940
    %950 = vmatprep.subr.mxu0 %v745
    %951 = vmatpush1.msra.mxu0 %v744
    %952 = vmatprep.subr.mxu0 %v943
    %953 = vmatpush1.msra.mxu0 %v942
    %954 = vmatprep.subr.mxu0 0.0
    %955 = vmatpush1.msra.mxu0 0.0
    %956 = vmatprep.subr.mxu0 0.0
    %957 = vmatpush1.msra.mxu0 0.0
    %958 = vmatprep.subr.mxu0 0.0
    %959 = vmatpush1.msra.mxu0 0.0
    %960 = vmatprep.subr.mxu0 0.0
    %961 = vmatpush1.msra.mxu0 0.0
    %962 = vmatprep.subr.mxu0 0.0
    %963 = vmatpush1.msra.mxu0 0.0
    %964 = vmatprep.subr.mxu0 0.0
    %965 = vmatpush1.msra.mxu0 0.0
    %966 = vmatprep.subr.mxu0 0.0
    %967 = vmatpush1.msra.mxu0 0.0
    %968 = vmatprep.subr.mxu0 0.0
    %969 = vmatpush1.msra.mxu0 0.0
    %970 = vmatprep.subr.mxu0 0.0
    %971 = vmatpush1.msra.mxu0 0.0
    %972 = vmatprep.subr.mxu0 0.0
    %973 = vmatpush1.msra.mxu0 0.0
    %974 = vmatprep.subr.mxu0 0.0
    %975 = vmatpush1.msra.mxu0 0.0
    %976 = vmatprep.subr.mxu0 0.0
    %977 = vmatpush1.msra.mxu0 0.0
    %978 = vmatprep.subr.mxu0 0.0
    %979 = vmatpush1.msra.mxu0 0.0
    %980 = vmatprep.subr.mxu0 0.0
    %981 = vmatpush1.msra.mxu0 0.0
    %982 = vmatprep.subr.mxu0 0.0
    %983 = vmatpush1.msra.mxu0 0.0
    %984 = vmatprep.subr.mxu0 0.0
    %985 = vmatpush1.msra.mxu0 0.0
    %986 = vmatprep.subr.mxu0 0.0
    %987 = vmatpush1.msra.mxu0 0.0
    %988 = vmatprep.subr.mxu0 0.0
    %989 = vmatpush1.msra.mxu0 0.0
    %990 = vmatprep.subr.mxu0 0.0
    %991 = vmatpush1.msra.mxu0 0.0
    %992 = vmatprep.subr.mxu0 0.0
    %993 = vmatpush1.msra.mxu0 0.0
    %994 = vmatprep.subr.mxu0 0.0
    %995 = vmatpush1.msra.mxu0 0.0
    %996 = vmatprep.subr.mxu0 0.0
    %997 = vmatpush1.msra.mxu0 0.0
    %998 = vmatprep.subr.mxu0 0.0
    %999 = vmatpush1.msra.mxu0 0.0
    %1000 = vmatprep.subr.mxu0 0.0
    %1001 = vmatpush1.msra.mxu0 0.0
    %1002 = vmatprep.subr.mxu0 0.0
    %1003 = vmatpush1.msra.mxu0 0.0
    %1004 = vmatprep.subr.mxu0 0.0
    %1005 = vmatpush1.msra.mxu0 0.0
    %1006 = vmatprep.subr.mxu0 0.0
    %1007 = vmatpush1.msra.mxu0 0.0
    %1008 = vmatprep.subr.mxu0 0.0
    %1009 = vmatpush1.msra.mxu0 0.0
    %1010 = vmatprep.subr.mxu0 0.0
    %1011 = vmatpush1.msra.mxu0 0.0
    %1012 = vmatprep.mubr.f32.mxu0 0.0
    %1013 = vmatmul.mubr.f32.gmra.mrb[0].mxu0 %v946
    %v1014 = vpop.f32.mrb[0].mxu0
    %v1015 = vadd.f32 0.0, %v1014
    %v1016 = vpop.f32.mrb[0].mxu0
    %v1017 = vadd.f32 0.0, %v1016
    %1018 = vdwg.mxu0
    %v1019 = vadd.f32 %v924, %v1015
    %v1020 = vadd.f32 %v926, %v1017
    %v1021 = vadd.f32 %v1019, %v1020
    %1022 = vadd.xlane.f32.xlu0 %v1021
    %v1023 = vpop.xlane.xlu0 %1022
    %v1024 = vmul.f32 %v1023, 0.00390625
    %v1025 = vsub.f32 %v1019, %v1024
    %v1026 = vsub.f32 %v1020, %v1024
    %v1027 = vmul.f32 %v1025, %v1025
    %v1028 = vmul.f32 %v1026, %v1026
    %v1029 = vadd.f32 %v1027, %v1028
    %1030 = vadd.xlane.f32.xlu0 %v1029
    %v1031 = vpop.xlane.xlu0 %1030
    %v1032 = vmul.f32 %v1031, 0.00390625
    %v1033 = vadd.f32 %v1032, 1e-05
    %v1034 = vrsqrt.pop %v1033
    %v1035 = vmul.f32 %v1025, %v1034
    %v1036 = vmul.f32 %v1026, %v1034
    %v1037 = vmax.f32 %v1035, 0.0
    %v1038 = vmax.f32 %v1036, 0.0
    %1039 = vrot.lane.b32.xlu0 %v1037, 16
    %v1040 = vpop.permute.xlu0 %1039
    %1041 = vrot.lane.b32.xlu0 %v1038, 16
    %v1042 = vpop.permute.xlu0 %1041
    %v1043 = vsel %vm57, %v1040, %v1042
    %v1044 = vsel %vm57, %v1042, %v1040
    %1045 = vrot.lane.b32.xlu0 %v1037, 112
    %v1046 = vpop.permute.xlu0 %1045
    %1047 = vrot.lane.b32.xlu0 %v1038, 112
    %v1048 = vpop.permute.xlu0 %1047
    %v1049 = vsel %vm114, %v1046, %v1048
    %v1050 = vsel %vm114, %v1048, %v1046
    %v1051 = vsel %vm94, %v1044, %v1049
    %v1052 = vsel %vm95, %v1043, %v1050
    %v1053 = vsel %vm96, %v1044, %v1049
    %v1054 = vsel %vm97, %v1043, %v1050
    %1055 = vrot.lane.b32.xlu0 %v1051, 1
    %v1056 = vpop.permute.xlu0 %1055
    %1057 = vrot.lane.b32.xlu0 %v1052, 1
    %v1058 = vpop.permute.xlu0 %1057
    %v1059 = vsel %vm91, %v1056, %v1058
    %v1060 = vsel %vm91, %v1058, %v1056
    %1061 = vrot.lane.b32.xlu0 %v1051, 127
    %v1062 = vpop.permute.xlu0 %1061
    %1063 = vrot.lane.b32.xlu0 %v1052, 127
    %v1064 = vpop.permute.xlu0 %1063
    %v1065 = vsel %vm131, %v1062, %v1064
    %v1066 = vsel %vm131, %v1064, %v1062
    %v1067 = vsel %vm98, %v1060, %v1065
    %v1068 = vsel %vm99, %v1059, %v1066
    %v1069 = vsel %vm100, %v1060, %v1065
    %v1070 = vsel %vm101, %v1059, %v1066
    %v1071 = vld [vmem:[#allocation7] sm:$0xff]
    %1072 = vrot.lane.b32.xlu0 %v1037, 1
    %v1073 = vpop.permute.xlu0 %1072
    %1074 = vrot.lane.b32.xlu0 %v1038, 1
    %v1075 = vpop.permute.xlu0 %1074
    %v1076 = vsel %vm91, %v1073, %v1075
    %v1077 = vsel %vm91, %v1075, %v1073
    %1078 = vrot.lane.b32.xlu0 %v1037, 127
    %v1079 = vpop.permute.xlu0 %1078
    %1080 = vrot.lane.b32.xlu0 %v1038, 127
    %v1081 = vpop.permute.xlu0 %1080
    %v1082 = vsel %vm131, %v1079, %v1081
    %v1083 = vsel %vm131, %v1081, %v1079
    %v1084 = vsel %vm98, %v1077, %v1082
    %v1085 = vsel %vm99, %v1076, %v1083
    %v1086 = vsel %vm100, %v1077, %v1082
    %v1087 = vsel %vm101, %v1076, %v1083
    %1089 = vrot.lane.b32.xlu0 %v1071, 104
    %v1090 = vpop.permute.xlu0 %1089
    %v1091 = vsel %vm158, %v1090, 0
    %1093 = vmatprep.subr.mxu0 %v1085
    %1094 = vmatpush1.msra.mxu0 %v1084
    %1095 = vmatprep.subr.mxu0 %v1038
    %1096 = vmatpush1.msra.mxu0 %v1037
    %1097 = vmatprep.subr.mxu0 %v1087
    %1098 = vmatpush1.msra.mxu0 %v1086
    %1099 = vmatprep.subr.mxu0 0.0
    %1100 = vmatpush1.msra.mxu0 0.0
    %1101 = vmatprep.subr.mxu0 0.0
    %1102 = vmatpush1.msra.mxu0 0.0
    %1103 = vmatprep.subr.mxu0 0.0
    %1104 = vmatpush1.msra.mxu0 0.0
    %1105 = vmatprep.subr.mxu0 0.0
    %1106 = vmatpush1.msra.mxu0 0.0
    %1107 = vmatprep.subr.mxu0 0.0
    %1108 = vmatpush1.msra.mxu0 0.0
    %1109 = vmatprep.subr.mxu0 0.0
    %1110 = vmatpush1.msra.mxu0 0.0
    %1111 = vmatprep.subr.mxu0 0.0
    %1112 = vmatpush1.msra.mxu0 0.0
    %1113 = vmatprep.subr.mxu0 0.0
    %1114 = vmatpush1.msra.mxu0 0.0
    %1115 = vmatprep.subr.mxu0 0.0
    %1116 = vmatpush1.msra.mxu0 0.0
    %1117 = vmatprep.subr.mxu0 0.0
    %1118 = vmatpush1.msra.mxu0 0.0
    %1119 = vmatprep.subr.mxu0 0.0
    %1120 = vmatpush1.msra.mxu0 0.0
    %1121 = vmatprep.subr.mxu0 0.0
    %1122 = vmatpush1.msra.mxu0 0.0
    %1123 = vmatprep.subr.mxu0 0.0
    %1124 = vmatpush1.msra.mxu0 0.0
    %1125 = vmatprep.subr.mxu0 0.0
    %1126 = vmatpush1.msra.mxu0 0.0
    %1127 = vmatprep.subr.mxu0 0.0
    %1128 = vmatpush1.msra.mxu0 0.0
    %1129 = vmatprep.subr.mxu0 0.0
    %1130 = vmatpush1.msra.mxu0 0.0
    %1131 = vmatprep.subr.mxu0 0.0
    %1132 = vmatpush1.msra.mxu0 0.0
    %1133 = vmatprep.subr.mxu0 0.0
    %1134 = vmatpush1.msra.mxu0 0.0
    %1135 = vmatprep.subr.mxu0 0.0
    %1136 = vmatpush1.msra.mxu0 0.0
    %1137 = vmatprep.subr.mxu0 0.0
    %1138 = vmatpush1.msra.mxu0 0.0
    %1139 = vmatprep.subr.mxu0 0.0
    %1140 = vmatpush1.msra.mxu0 0.0
    %1141 = vmatprep.subr.mxu0 0.0
    %1142 = vmatpush1.msra.mxu0 0.0
    %1143 = vmatprep.subr.mxu0 0.0
    %1144 = vmatpush1.msra.mxu0 0.0
    %1145 = vmatprep.subr.mxu0 0.0
    %1146 = vmatpush1.msra.mxu0 0.0
    %1147 = vmatprep.subr.mxu0 0.0
    %1148 = vmatpush1.msra.mxu0 0.0
    %1149 = vmatprep.subr.mxu0 0.0
    %1150 = vmatpush1.msra.mxu0 0.0
    %1151 = vmatprep.subr.mxu0 0.0
    %1152 = vmatpush1.msra.mxu0 0.0
    %1153 = vmatprep.subr.mxu0 0.0
    %1154 = vmatpush1.msra.mxu0 0.0
    %1155 = vmatprep.subr.mxu0 0.0
    %1156 = vmatpush1.msra.mxu0 0.0
    %1157 = vmatprep.mubr.f32.mxu0 0.0
    %1158 = vmatmul.mubr.f32.gmra.mrb[0].mxu0 %v1091
    %v1159 = vpop.f32.mrb[0].mxu0
    %v1160 = vadd.f32 0.0, %v1159
    %v1161 = vpop.f32.mrb[0].mxu0
    %v1162 = vadd.f32 0.0, %v1161
    %1163 = vdwg.mxu0
    %v1164 = vsel %vm158, %v1071, 0
    %1166 = vmatprep.subr.mxu0 %v1068
    %1167 = vmatpush1.msra.mxu0 %v1067
    %1168 = vmatprep.subr.mxu0 %v1052
    %1169 = vmatpush1.msra.mxu0 %v1051
    %1170 = vmatprep.subr.mxu0 %v1070
    %1171 = vmatpush1.msra.mxu0 %v1069
    %1172 = vmatprep.subr.mxu0 0.0
    %1173 = vmatpush1.msra.mxu0 0.0
    %1174 = vmatprep.subr.mxu0 0.0
    %1175 = vmatpush1.msra.mxu0 0.0
    %1176 = vmatprep.subr.mxu0 0.0
    %1177 = vmatpush1.msra.mxu0 0.0
    %1178 = vmatprep.subr.mxu0 0.0
    %1179 = vmatpush1.msra.mxu0 0.0
    %1180 = vmatprep.subr.mxu0 0.0
    %1181 = vmatpush1.msra.mxu0 0.0
    %1182 = vmatprep.subr.mxu0 0.0
    %1183 = vmatpush1.msra.mxu0 0.0
    %1184 = vmatprep.subr.mxu0 0.0
    %1185 = vmatpush1.msra.mxu0 0.0
    %1186 = vmatprep.subr.mxu0 0.0
    %1187 = vmatpush1.msra.mxu0 0.0
    %1188 = vmatprep.subr.mxu0 0.0
    %1189 = vmatpush1.msra.mxu0 0.0
    %1190 = vmatprep.subr.mxu0 0.0
    %1191 = vmatpush1.msra.mxu0 0.0
    %1192 = vmatprep.subr.mxu0 0.0
    %1193 = vmatpush1.msra.mxu0 0.0
    %1194 = vmatprep.subr.mxu0 0.0
    %1195 = vmatpush1.msra.mxu0 0.0
    %1196 = vmatprep.subr.mxu0 0.0
    %1197 = vmatpush1.msra.mxu0 0.0
    %1198 = vmatprep.subr.mxu0 0.0
    %1199 = vmatpush1.msra.mxu0 0.0
    %1200 = vmatprep.subr.mxu0 0.0
    %1201 = vmatpush1.msra.mxu0 0.0
    %1202 = vmatprep.subr.mxu0 0.0
    %1203 = vmatpush1.msra.mxu0 0.0
    %1204 = vmatprep.subr.mxu0 0.0
    %1205 = vmatpush1.msra.mxu0 0.0
    %1206 = vmatprep.subr.mxu0 0.0
    %1207 = vmatpush1.msra.mxu0 0.0
    %1208 = vmatprep.subr.mxu0 0.0
    %1209 = vmatpush1.msra.mxu0 0.0
    %1210 = vmatprep.subr.mxu0 0.0
    %1211 = vmatpush1.msra.mxu0 0.0
    %1212 = vmatprep.subr.mxu0 0.0
    %1213 = vmatpush1.msra.mxu0 0.0
    %1214 = vmatprep.subr.mxu0 0.0
    %1215 = vmatpush1.msra.mxu0 0.0
    %1216 = vmatprep.subr.mxu0 0.0
    %1217 = vmatpush1.msra.mxu0 0.0
    %1218 = vmatprep.subr.mxu0 0.0
    %1219 = vmatpush1.msra.mxu0 0.0
    %1220 = vmatprep.subr.mxu0 0.0
    %1221 = vmatpush1.msra.mxu0 0.0
    %1222 = vmatprep.subr.mxu0 0.0
    %1223 = vmatpush1.msra.mxu0 0.0
    %1224 = vmatprep.subr.mxu0 0.0
    %1225 = vmatpush1.msra.mxu0 0.0
    %1226 = vmatprep.subr.mxu0 0.0
    %1227 = vmatpush1.msra.mxu0 0.0
    %1228 = vmatprep.subr.mxu0 0.0
    %1229 = vmatpush1.msra.mxu0 0.0
    %1230 = vmatprep.mubr.f32.mxu0 0.0
    %1231 = vmatmul.mubr.f32.gmra.mrb[0].mxu0 %v1164
    %v1232 = vpop.f32.mrb[0].mxu0
    %v1233 = vadd.f32 %v1160, %v1232
    %v1234 = vpop.f32.mrb[0].mxu0
    %v1235 = vadd.f32 %v1162, %v1234
    %1236 = vdwg.mxu0
    %1237 = vrot.lane.b32.xlu0 %v1053, 1
    %v1238 = vpop.permute.xlu0 %1237
    %1239 = vrot.lane.b32.xlu0 %v1054, 1
    %v1240 = vpop.permute.xlu0 %1239
    %v1241 = vsel %vm91, %v1238, %v1240
    %v1242 = vsel %vm91, %v1240, %v1238
    %1243 = vrot.lane.b32.xlu0 %v1053, 127
    %v1244 = vpop.permute.xlu0 %1243
    %1245 = vrot.lane.b32.xlu0 %v1054, 127
    %v1246 = vpop.permute.xlu0 %1245
    %v1247 = vsel %vm131, %v1244, %v1246
    %v1248 = vsel %vm131, %v1246, %v1244
    %v1249 = vsel %vm98, %v1242, %v1247
    %v1250 = vsel %vm99, %v1241, %v1248
    %v1251 = vsel %vm100, %v1242, %v1247
    %v1252 = vsel %vm101, %v1241, %v1248
    %1253 = vrot.lane.b32.xlu0 %v1071, 80
    %v1254 = vpop.permute.xlu0 %1253
    %v1255 = vsel %vm158, %v1254, 0
    %1257 = vmatprep.subr.mxu0 %v1250
    %1258 = vmatpush1.msra.mxu0 %v1249
    %1259 = vmatprep.subr.mxu0 %v1054
    %1260 = vmatpush1.msra.mxu0 %v1053
    %1261 = vmatprep.subr.mxu0 %v1252
    %1262 = vmatpush1.msra.mxu0 %v1251
    %1263 = vmatprep.subr.mxu0 0.0
    %1264 = vmatpush1.msra.mxu0 0.0
    %1265 = vmatprep.subr.mxu0 0.0
    %1266 = vmatpush1.msra.mxu0 0.0
    %1267 = vmatprep.subr.mxu0 0.0
    %1268 = vmatpush1.msra.mxu0 0.0
    %1269 = vmatprep.subr.mxu0 0.0
    %1270 = vmatpush1.msra.mxu0 0.0
    %1271 = vmatprep.subr.mxu0 0.0
    %1272 = vmatpush1.msra.mxu0 0.0
    %1273 = vmatprep.subr.mxu0 0.0
    %1274 = vmatpush1.msra.mxu0 0.0
    %1275 = vmatprep.subr.mxu0 0.0
    %1276 = vmatpush1.msra.mxu0 0.0
    %1277 = vmatprep.subr.mxu0 0.0
    %1278 = vmatpush1.msra.mxu0 0.0
    %1279 = vmatprep.subr.mxu0 0.0
    %1280 = vmatpush1.msra.mxu0 0.0
    %1281 = vmatprep.subr.mxu0 0.0
    %1282 = vmatpush1.msra.mxu0 0.0
    %1283 = vmatprep.subr.mxu0 0.0
    %1284 = vmatpush1.msra.mxu0 0.0
    %1285 = vmatprep.subr.mxu0 0.0
    %1286 = vmatpush1.msra.mxu0 0.0
    %1287 = vmatprep.subr.mxu0 0.0
    %1288 = vmatpush1.msra.mxu0 0.0
    %1289 = vmatprep.subr.mxu0 0.0
    %1290 = vmatpush1.msra.mxu0 0.0
    %1291 = vmatprep.subr.mxu0 0.0
    %1292 = vmatpush1.msra.mxu0 0.0
    %1293 = vmatprep.subr.mxu0 0.0
    %1294 = vmatpush1.msra.mxu0 0.0
    %1295 = vmatprep.subr.mxu0 0.0
    %1296 = vmatpush1.msra.mxu0 0.0
    %1297 = vmatprep.subr.mxu0 0.0
    %1298 = vmatpush1.msra.mxu0 0.0
    %1299 = vmatprep.subr.mxu0 0.0
    %1300 = vmatpush1.msra.mxu0 0.0
    %1301 = vmatprep.subr.mxu0 0.0
    %1302 = vmatpush1.msra.mxu0 0.0
    %1303 = vmatprep.subr.mxu0 0.0
    %1304 = vmatpush1.msra.mxu0 0.0
    %1305 = vmatprep.subr.mxu0 0.0
    %1306 = vmatpush1.msra.mxu0 0.0
    %1307 = vmatprep.subr.mxu0 0.0
    %1308 = vmatpush1.msra.mxu0 0.0
    %1309 = vmatprep.subr.mxu0 0.0
    %1310 = vmatpush1.msra.mxu0 0.0
    %1311 = vmatprep.subr.mxu0 0.0
    %1312 = vmatpush1.msra.mxu0 0.0
    %1313 = vmatprep.subr.mxu0 0.0
    %1314 = vmatpush1.msra.mxu0 0.0
    %1315 = vmatprep.subr.mxu0 0.0
    %1316 = vmatpush1.msra.mxu0 0.0
    %1317 = vmatprep.subr.mxu0 0.0
    %1318 = vmatpush1.msra.mxu0 0.0
    %1319 = vmatprep.subr.mxu0 0.0
    %1320 = vmatpush1.msra.mxu0 0.0
    %1321 = vmatprep.mubr.f32.mxu0 0.0
    %1322 = vmatmul.mubr.f32.gmra.mrb[0].mxu0 %v1255
    %v1323 = vpop.f32.mrb[0].mxu0
    %v1324 = vadd.f32 0.0, %v1323
    %v1325 = vpop.f32.mrb[0].mxu0
    %v1326 = vadd.f32 0.0, %v1325
    %1327 = vdwg.mxu0
    %v1328 = vadd.f32 %v1233, %v1324
    %v1329 = vadd.f32 %v1235, %v1326
    %v1330 = vadd.f32 %v1328, %v1329
    %1331 = vadd.xlane.f32.xlu0 %v1330
    %v1332 = vpop.xlane.xlu0 %1331
    %v1333 = vmul.f32 %v1332, 0.00390625
    %v1334 = vsub.f32 %v1328, %v1333
    %v1335 = vsub.f32 %v1329, %v1333
    %v1336 = vmul.f32 %v1334, %v1334
    %v1337 = vmul.f32 %v1335, %v1335
    %v1338 = vadd.f32 %v1336, %v1337
    %1339 = vadd.xlane.f32.xlu0 %v1338
    %v1340 = vpop.xlane.xlu0 %1339
    %v1341 = vmul.f32 %v1340, 0.00390625
    %v1342 = vadd.f32 %v1341, 1e-05
    %v1343 = vrsqrt.pop %v1342
    %v1344 = vmul.f32 %v1334, %v1343
    %v1345 = vmul.f32 %v1335, %v1343
    %v1346 = vadd.f32 %v728, %v1344
    %v1347 = vadd.f32 %v729, %v1345
    %s1348 = scalar_lea.vmem [#allocation8], 16
    %1349 = vst [vmem:[%s1348] sm:$0xff] %v1346
    %1350 = vst [vmem:[%s1348 + $0x8] sm:$0xff] %v1347
    // Predicated region
    $region26: #{tpu_custom_call.1} parent=1 // pred_check
      _
    $region27: #{tpu_custom_call.1} parent=1 // pred_check_branch
      %1352 = sbr.rel (0) target = $region29
    $region28: #{tpu_custom_call.1} parent=1 // pred_region
      %s1354 = ssub.s32 512, 512
      %1355 = vsyncadd [#allocation4], %s1354
      %s1356 = sshll.u32 [#allocation8], 4
      %s1357 = int_to_ptr.vmem [resolvable:$true] %s1356
      %1362 = dma.vmem_to_hbm [thread:$0]  %s1357, 512, %s3, [#allocation4], 256, 256, 16
    $region29: #{tpu_custom_call.1} parent=1 // pred_fallthru
      _
    // Predicated region
    $region30: #{tpu_custom_call.1} parent=1 // pred_check
      _
    $region31: #{tpu_custom_call.1} parent=1 // pred_check_branch
      %1364 = sbr.rel (0) target = $region33
    $region32: #{tpu_custom_call.1} parent=1 // pred_region
      %1365 = dma.done [#allocation4], 512
    $region33: #{tpu_custom_call.1} parent=1 // pred_fallthru
      _
    %1366 = vsyncpa [#allocation3], 1
    %1367 = vsyncpa [#allocation6], 1
    %1368 = vsyncpa [#allocation4], 1

</llo_original>
